<compile_context>
chip_gen: v7x
topology: tpu7x:2x2x1
jax: 0.10.0
libtpu: 0.0.40
codegen_flags: <defaults>
</compile_context>

<pallas_src>
import jax
import jax.numpy as jnp
from jax.experimental import pallas as pl
from jax.experimental.pallas import tpu as pltpu


def vcm_kernel(xv_ref, xa_ref, w1v_ref, w1a_ref, b1_ref, w2_ref, b2_ref, o_ref):
    # xv_ref : (TN, Sv*C*HW) f32   video pixels, row-major flattened
    # xa_ref : (TN, Sa*C*HW) f32   audio pixels, row-major flattened
    # w1v    : (Sv*C*HW, S*D) bf16 backbone weight expanded over HW (1/HW folded
    #                              in), block-diagonal over video segments,
    #                              audio columns zero
    # w1a    : (Sa*C*HW, S*D) bf16 same for audio segments (video columns zero)
    # b1     : (1, S*D) f32        backbone bias tiled over segments
    # w2     : (S*D, Kp) bf16      last_fc weight tiled over segments, 1/S folded in
    # b2     : (1, Kp) f32         last_fc bias, zero-padded to Kp lanes
    # o_ref  : (TN, Kp) f32
    xv = xv_ref[...].astype(jnp.bfloat16)                       # in-VMEM cast only
    xa = xa_ref[...].astype(jnp.bfloat16)
    feat = jnp.dot(xv, w1v_ref[...], preferred_element_type=jnp.float32)
    feat = feat + jnp.dot(xa, w1a_ref[...], preferred_element_type=jnp.float32)
    feat = jnp.maximum(feat + b1_ref[...], 0.0)                 # (TN, S*D) f32
    out = jnp.dot(feat.astype(jnp.bfloat16), w2_ref[...],
                  preferred_element_type=jnp.float32) + b2_ref[...]
    o_ref[...] = out.astype(o_ref.dtype)                        # lane-dense store


def _tpu_layout_params():
    """Returns (multi_core, target x-block bytes per grid step)."""
    try:
        kind = jax.devices()[0].device_kind.lower()
    except Exception:  # pragma: no cover - be robust on exotic runtimes
        kind = ""
    multi_core = "v7" in kind          # v7x: 2 TensorCores, 64 MiB VMEM
    # Single-core 128 MiB-VMEM parts (v5e/v6e) want big contiguous DMAs;
    # keep blocks smaller on v7x (two cores each double-buffering).
    target_bytes = (6 << 20) if multi_core else (12 << 20)
    return multi_core, target_bytes


def vcm_forward(x_video, x_audio, params):
    """x_video: (B, n_samples, Sv, C, H, W); x_audio: (B, n_samples, Sa, C, H, W)."""
    wbb, bbb, wfc, bfc = params

    B, n_samples, Sv, C, H, W = x_video.shape
    _, _, Sa, Ca, Ha, Wa = x_audio.shape
    assert (Ca, Ha, Wa) == (C, H, W)
    N = B * n_samples
    HW = H * W
    S = Sv + Sa
    D = wbb.shape[1]
    K = wfc.shape[1]
    SD = S * D
    RV = Sv * C * HW                    # video row width (flattened)
    RA = Sa * C * HW                    # audio row width (flattened)

    # ---- weight prep (tiny, one-time): fold 1/HW and 1/S, expand over HW,
    #      build segment block structure, cast MXU operands to bf16.
    w1hw = jnp.broadcast_to((wbb.astype(jnp.float32) / HW)[:, None, :],
                            (C, HW, D)).reshape(C * HW, D)      # (C*HW, D)
    w1v = jnp.einsum('st,pd->sptd', jnp.eye(Sv, dtype=jnp.float32),
                     w1hw).reshape(RV, Sv * D)
    w1v = jnp.pad(w1v, ((0, 0), (0, Sa * D))).astype(jnp.bfloat16)   # (RV, S*D)
    w1a = jnp.einsum('st,pd->sptd', jnp.eye(Sa, dtype=jnp.float32),
                     w1hw).reshape(RA, Sa * D)
    w1a = jnp.pad(w1a, ((0, 0), (Sv * D, 0))).astype(jnp.bfloat16)   # (RA, S*D)
    b1 = jnp.tile(bbb.astype(jnp.float32), (1, S))                    # (1, S*D)

    Kp = ((K + 127) // 128) * 128        # lane-dense output width
    w2 = jnp.tile(wfc.astype(jnp.float32), (S, 1)) / S                # segment mean folded
    w2 = jnp.pad(w2, ((0, 0), (0, Kp - K))).astype(jnp.bfloat16)      # (S*D, Kp)
    b2 = jnp.pad(bfc.astype(jnp.float32), ((0, 0), (0, Kp - K)))      # (1, Kp)

    # ---- x streams: free row-major reshapes; stay f32 (no HBM cast pass).
    xv = x_video.reshape(N, RV).astype(jnp.float32)
    xa = x_audio.reshape(N, RA).astype(jnp.float32)

    # ---- N-axis tiling: no padding (Pallas masks the ragged last block).
    multi_core, target_bytes = _tpu_layout_params()
    bytes_per_row = (RV + RA) * 4        # f32 streamed
    tn = target_bytes // max(1, bytes_per_row)
    tn = max(8, min(2048, (tn // 8) * 8))
    if N <= tn:
        tn = N                           # single step; full-dim block is legal
    elif multi_core:
        # v7x: at least ~4 grid steps so both TensorCores get >= 2 blocks.
        tn4 = (((N + 3) // 4) // 8) * 8
        if tn4 >= 8:
            tn = min(tn, tn4)
    grid = (pl.cdiv(N, tn),)

    weight_bytes = (w1v.size + w1a.size + w2.size) * 2 + (b1.size + b2.size) * 4
    x_block_bytes = tn * bytes_per_row
    out_block_bytes = tn * Kp * 4
    vmem_need = (2 * (x_block_bytes + out_block_bytes) + weight_bytes
                 + x_block_bytes // 2 + (4 << 20))   # + in-kernel bf16 temp + headroom
    vmem_limit = int(min(max(vmem_need, 32 << 20), 64 << 20))

    cost = pl.CostEstimate(
        flops=2 * N * (RV * SD + RA * SD + SD * Kp),
        transcendentals=0,
        bytes_accessed=N * bytes_per_row + N * Kp * 4 + weight_bytes)

    out = pl.pallas_call(
        vcm_kernel,
        out_shape=jax.ShapeDtypeStruct((N, Kp), jnp.float32),
        grid_spec=pltpu.PrefetchScalarGridSpec(
            num_scalar_prefetch=0,
            grid=grid,
            in_specs=[
                pl.BlockSpec((tn, RV), lambda i: (i, 0)),
                pl.BlockSpec((tn, RA), lambda i: (i, 0)),
                pl.BlockSpec((RV, SD), lambda i: (0, 0)),
                pl.BlockSpec((RA, SD), lambda i: (0, 0)),
                pl.BlockSpec((1, SD), lambda i: (0, 0)),
                pl.BlockSpec((SD, Kp), lambda i: (0, 0)),
                pl.BlockSpec((1, Kp), lambda i: (0, 0)),
            ],
            out_specs=pl.BlockSpec((tn, Kp), lambda i: (i, 0)),
        ),
        compiler_params=pltpu.CompilerParams(
            dimension_semantics=("parallel",),
            vmem_limit_bytes=vmem_limit),
        cost_estimate=cost,
    )(xv, xa, w1v, w1a, b1, w2, b2)

    return out[:, :K]


def vcm_reference(x_video, x_audio, params):
    """Pure-JAX f32 reference mirroring the PyTorch forward semantics."""
    wbb, bbb, wfc, bfc = params
    x = jnp.concatenate([x_video, x_audio], axis=2)     # nn_input
    B, n_samples, S, C, H, W = x.shape
    x = x.reshape(-1, S, C, H * W).astype(jnp.float32)
    pooled = jnp.mean(x, axis=-1)                       # (N, S, C)
    feat = jnp.maximum(pooled @ wbb + bbb, 0.0)         # (N, S, D)  nn_backbone
    feat = feat.reshape(-1, S, wbb.shape[1])            # x.view(-1, n_segment, last_num)
    feat = feat.mean(axis=1)                            # x.mean(dim=1)
    return feat @ wfc + bfc                             # last_fc


if __name__ == "__main__":
    key = jax.random.PRNGKey(0)
    k1, k2, k3, k4, k5, k6 = jax.random.split(key, 6)

    # Small shapes consistent with the module's forward
    B, n_samples = 2, 2
    n_video_segments, n_audio_segments = 3, 1
    C, H, W = 4, 16, 16
    features_dim_out = 32     # nn_backbone.features_dim_out (last_num)
    num_class = 8             # args['model']['num_class']

    x_video = jax.random.normal(
        k1, (B, n_samples, n_video_segments, C, H, W), dtype=jnp.float32)
    x_audio = jax.random.normal(
        k2, (B, n_samples, n_audio_segments, C, H, W), dtype=jnp.float32)

    # Deterministic synthetic parameters
    wbb = 0.1 * jax.random.normal(k3, (C, features_dim_out), dtype=jnp.float32)
    bbb = 0.01 * jax.random.normal(k4, (1, features_dim_out), dtype=jnp.float32)
    wfc = 0.1 * jax.random.normal(k5, (features_dim_out, num_class), dtype=jnp.float32)
    bfc = 0.01 * jax.random.normal(k6, (1, num_class), dtype=jnp.float32)
    params = (wbb, bbb, wfc, bfc)

    out = vcm_forward(x_video, x_audio, params)
    out = jax.block_until_ready(out)

    ref = vcm_reference(x_video, x_audio, params)
    assert out.shape == (B * n_samples, num_class), out.shape
    # Tolerance accounts for bf16 MXU operands (x cast in-kernel, weights
    # stored bf16); accumulation is f32 so the error stays bounded.
    assert jnp.allclose(out, ref, atol=2e-3, rtol=2e-2), (
        f"max err {jnp.max(jnp.abs(out - ref))}")

    print("KERNEL_OK")
</pallas_src>

<mosaic_0001>
module attributes {stable_mosaic.version = 11 : i64} {
  func.func @vcm_kernel(%arg0: i32, %arg1: memref<4x3072xf32, #tpu.memory_space<vmem>>, %arg2: memref<4x1024xf32, #tpu.memory_space<vmem>>, %arg3: memref<3072x128xbf16, #tpu.memory_space<vmem>>, %arg4: memref<1024x128xbf16, #tpu.memory_space<vmem>>, %arg5: memref<1x128xf32, #tpu.memory_space<vmem>>, %arg6: memref<128x128xbf16, #tpu.memory_space<vmem>>, %arg7: memref<1x128xf32, #tpu.memory_space<vmem>>, %arg8: memref<4x128xf32, #tpu.memory_space<vmem>>) attributes {dimension_semantics = [#tpu.dimension_semantics<parallel>], iteration_bounds = array<i64: 1>, scalar_prefetch = 0 : i64, scratch_operands = 0 : i64, tpu.core_type = #tpu.core_type<tc>, window_params = [{transform_indices = @transform_0, window_bounds = array<i64: 4, 3072>}, {transform_indices = @transform_1, window_bounds = array<i64: 4, 1024>}, {pipeline_mode = #tpu.pipeline_mode<synchronous>, transform_indices = @transform_2, window_bounds = array<i64: 3072, 128>}, {pipeline_mode = #tpu.pipeline_mode<synchronous>, transform_indices = @transform_3, window_bounds = array<i64: 1024, 128>}, {pipeline_mode = #tpu.pipeline_mode<synchronous>, transform_indices = @transform_4, window_bounds = array<i64: 1, 128>}, {pipeline_mode = #tpu.pipeline_mode<synchronous>, transform_indices = @transform_5, window_bounds = array<i64: 128, 128>}, {pipeline_mode = #tpu.pipeline_mode<synchronous>, transform_indices = @transform_6, window_bounds = array<i64: 1, 128>}, {transform_indices = @transform_7, window_bounds = array<i64: 4, 128>}]} {
    %c0 = arith.constant 0 : index
    %c0_0 = arith.constant 0 : index
    %0 = vector.load %arg1[%c0, %c0_0] : memref<4x3072xf32, #tpu.memory_space<vmem>>, vector<4x3072xf32>
    %1 = arith.truncf %0 : vector<4x3072xf32> to vector<4x3072xbf16>
    %c0_1 = arith.constant 0 : index
    %c0_2 = arith.constant 0 : index
    %2 = vector.load %arg2[%c0_1, %c0_2] : memref<4x1024xf32, #tpu.memory_space<vmem>>, vector<4x1024xf32>
    %3 = arith.truncf %2 : vector<4x1024xf32> to vector<4x1024xbf16>
    %c0_3 = arith.constant 0 : index
    %c0_4 = arith.constant 0 : index
    %4 = vector.load %arg3[%c0_3, %c0_4] : memref<3072x128xbf16, #tpu.memory_space<vmem>>, vector<3072x128xbf16>
    %cst = arith.constant dense<0.000000e+00> : vector<4x128xf32>
    %5 = tpu.matmul %1, %4, %cst {dimension_numbers = #tpu.dot_dimension_numbers<[1], [0], [0], [1], [0, 0, 1, 1], [], []>} : vector<4x3072xbf16>, vector<3072x128xbf16>, vector<4x128xf32> -> vector<4x128xf32>
    %c0_5 = arith.constant 0 : index
    %c0_6 = arith.constant 0 : index
    %6 = vector.load %arg4[%c0_5, %c0_6] : memref<1024x128xbf16, #tpu.memory_space<vmem>>, vector<1024x128xbf16>
    %cst_7 = arith.constant dense<0.000000e+00> : vector<4x128xf32>
    %7 = tpu.matmul %3, %6, %cst_7 {dimension_numbers = #tpu.dot_dimension_numbers<[1], [0], [0], [1], [0, 0, 1, 1], [], []>} : vector<4x1024xbf16>, vector<1024x128xbf16>, vector<4x128xf32> -> vector<4x128xf32>
    %8 = arith.addf %5, %7 : vector<4x128xf32>
    %c0_8 = arith.constant 0 : index
    %c0_9 = arith.constant 0 : index
    %9 = vector.load %arg5[%c0_8, %c0_9] : memref<1x128xf32, #tpu.memory_space<vmem>>, vector<1x128xf32>
    %10 = vector.broadcast %9 : vector<1x128xf32> to vector<4x128xf32>
    %11 = arith.addf %8, %10 : vector<4x128xf32>
    %cst_10 = arith.constant 0.000000e+00 : f32
    %12 = vector.broadcast %cst_10 : f32 to vector<4x128xf32>
    %13 = arith.maximumf %11, %12 : vector<4x128xf32>
    %14 = arith.truncf %13 : vector<4x128xf32> to vector<4x128xbf16>
    %c0_11 = arith.constant 0 : index
    %c0_12 = arith.constant 0 : index
    %15 = vector.load %arg6[%c0_11, %c0_12] : memref<128x128xbf16, #tpu.memory_space<vmem>>, vector<128x128xbf16>
    %cst_13 = arith.constant dense<0.000000e+00> : vector<4x128xf32>
    %16 = tpu.matmul %14, %15, %cst_13 {dimension_numbers = #tpu.dot_dimension_numbers<[1], [0], [0], [1], [0, 0, 1, 1], [], []>} : vector<4x128xbf16>, vector<128x128xbf16>, vector<4x128xf32> -> vector<4x128xf32>
    %c0_14 = arith.constant 0 : index
    %c0_15 = arith.constant 0 : index
    %17 = vector.load %arg7[%c0_14, %c0_15] : memref<1x128xf32, #tpu.memory_space<vmem>>, vector<1x128xf32>
    %18 = vector.broadcast %17 : vector<1x128xf32> to vector<4x128xf32>
    %19 = arith.addf %16, %18 : vector<4x128xf32>
    %c0_16 = arith.constant 0 : index
    %c0_17 = arith.constant 0 : index
    %20 = vector.load %arg8[%c0_16, %c0_17] : memref<4x128xf32, #tpu.memory_space<vmem>>, vector<4x128xf32>
    tpu.vector_store %arg8[%c0_16, %c0_17], %19 {strides = array<i32>} : memref<4x128xf32, #tpu.memory_space<vmem>>, vector<4x128xf32>,
    return
  }
  func.func @transform_0(%arg0: i32) -> (i32, i32) {
    %c0_i32 = arith.constant 0 : i32
    %c0_i32_0 = arith.constant 0 : i32
    return %arg0, %c0_i32 : i32, i32
  }
  func.func @transform_1(%arg0: i32) -> (i32, i32) {
    %c0_i32 = arith.constant 0 : i32
    %c0_i32_0 = arith.constant 0 : i32
    return %arg0, %c0_i32 : i32, i32
  }
  func.func @transform_2(%arg0: i32) -> (i32, i32) {
    %c0_i32 = arith.constant 0 : i32
    %c0_i32_0 = arith.constant 0 : i32
    %c0_i32_1 = arith.constant 0 : i32
    return %c0_i32, %c0_i32_0 : i32, i32
  }
  func.func @transform_3(%arg0: i32) -> (i32, i32) {
    %c0_i32 = arith.constant 0 : i32
    %c0_i32_0 = arith.constant 0 : i32
    %c0_i32_1 = arith.constant 0 : i32
    return %c0_i32, %c0_i32_0 : i32, i32
  }
  func.func @transform_4(%arg0: i32) -> (i32, i32) {
    %c0_i32 = arith.constant 0 : i32
    %c0_i32_0 = arith.constant 0 : i32
    %c0_i32_1 = arith.constant 0 : i32
    return %c0_i32, %c0_i32_0 : i32, i32
  }
  func.func @transform_5(%arg0: i32) -> (i32, i32) {
    %c0_i32 = arith.constant 0 : i32
    %c0_i32_0 = arith.constant 0 : i32
    %c0_i32_1 = arith.constant 0 : i32
    return %c0_i32, %c0_i32_0 : i32, i32
  }
  func.func @transform_6(%arg0: i32) -> (i32, i32) {
    %c0_i32 = arith.constant 0 : i32
    %c0_i32_0 = arith.constant 0 : i32
    %c0_i32_1 = arith.constant 0 : i32
    return %c0_i32, %c0_i32_0 : i32, i32
  }
  func.func @transform_7(%arg0: i32) -> (i32, i32) {
    %c0_i32 = arith.constant 0 : i32
    %c0_i32_0 = arith.constant 0 : i32
    return %arg0, %c0_i32 : i32, i32
  }
}

</mosaic_0001>

<llo_original>
// kernel: tpu_custom_call.1
$region0: #{tpu_custom_call.1}
  #allocation0 [shape = 'u32[]', space=smem, size = 0x4, offset = 0x4, fixed_abs, tag = 'smem constant byte address 0x4 - core index']
  #allocation1 [shape = 'u32[144,128]{1,0:T(1,128)}', space=vmem, size = 0x12000, scoped, tag = 'internal scratch']
  %s0 = inlined_call_operand.hbm [shape: f32[4,3072], index: 0, kind: input, shape index: {}]
  %s1 = inlined_call_operand.hbm [shape: f32[4,1024], index: 1, kind: input, shape index: {}]
  %s2 = inlined_call_operand.hbm [shape: bf16[3072,128], index: 2, kind: input, shape index: {}]
  %s3 = inlined_call_operand.hbm [shape: bf16[1024,128], index: 3, kind: input, shape index: {}]
  %s4 = inlined_call_operand.vmem [shape: f32[1,128], index: 4, kind: input, shape index: {}]
  %s5 = inlined_call_operand.hbm [shape: bf16[128,128], index: 5, kind: input, shape index: {}]
  %s6 = inlined_call_operand.vmem [shape: f32[1,128], index: 6, kind: input, shape index: {}]
  %s7 = inlined_call_operand.hbm [shape: f32[4,128], index: 7, kind: output, shape index: {}]
  %s8 = sld [smem:[#allocation0]]
  $region58: #{tpu_custom_call.1} parent=0
    _
  %s10 = ssub.s32 1, %s8
  %s11 = scalar_select 0, %s10, %s8
  $region1: #{tpu_custom_call.1} parent=0
    #allocation2 [shape = 'u8[49152]{0}', space=vmem, size = 0xc000, scoped, tag = 'input window, operand 0, single buffered']
    #allocation3 [shape = 's32[1]{0}', space=sflag, size = 0x4, scoped, tag = 'scoped memory for tpu_custom_call.1']
    #allocation4 [shape = 's32[1]{0}', space=sflag, size = 0x4, scoped, tag = 'scoped memory for tpu_custom_call.1']
    #allocation5 [shape = 'u8[16384]{0}', space=vmem, size = 0x4000, scoped, tag = 'input window, operand 1, single buffered']
    #allocation6 [shape = 's32[1]{0}', space=sflag, size = 0x4, scoped, tag = 'scoped memory for tpu_custom_call.1']
    #allocation7 [shape = 'u8[786432]{0}', space=vmem, size = 0xc0000, scoped, tag = 'input window, operand 2, single buffered']
    #allocation8 [shape = 'u8[262144]{0}', space=vmem, size = 0x40000, scoped, tag = 'input window, operand 3, single buffered']
    #allocation9 [shape = 's32[1]{0}', space=sflag, size = 0x4, scoped, tag = 'scoped memory for tpu_custom_call.1']
    #allocation10 [shape = 'u8[32768]{0}', space=vmem, size = 0x8000, scoped, tag = 'input window, operand 5, single buffered']
    #allocation11 [shape = 'u8[2048]{0}', space=vmem, size = 0x800, scoped, tag = 'output window, operand 0, single buffered']
    %12 = vsyncpa [#allocation3], 0
    %13 = vsyncpa [#allocation6], 0
    %14 = vsyncpa [#allocation9], 0
    %15 = vsyncpa [#allocation4], 0
    // Predicated region
    $region2: #{tpu_custom_call.1} parent=1 // pred_check
      _
    $region3: #{tpu_custom_call.1} parent=1 // pred_check_branch
      %17 = sbr.rel (0) target = $region5
    $region4: #{tpu_custom_call.1} parent=1 // pred_region
      %s19 = ssub.s32 1536, 1536
      %20 = vsyncadd [#allocation3], %s19
      %s22 = sshll.u32 [#allocation2], 4
      %s23 = int_to_ptr.vmem [resolvable:$true] %s22
      %25 = dma.hbm_to_vmem [thread:$0]  %s0, 1536, %s23, [#allocation3]
    $region5: #{tpu_custom_call.1} parent=1 // pred_fallthru
      _
    // Predicated region
    $region6: #{tpu_custom_call.1} parent=1 // pred_check
      _
    $region7: #{tpu_custom_call.1} parent=1 // pred_check_branch
      %27 = sbr.rel (0) target = $region9
    $region8: #{tpu_custom_call.1} parent=1 // pred_region
      %s29 = ssub.s32 512, 512
      %30 = vsyncadd [#allocation6], %s29
      %s32 = sshll.u32 [#allocation5], 4
      %s33 = int_to_ptr.vmem [resolvable:$true] %s32
      %35 = dma.hbm_to_vmem [thread:$0]  %s1, 512, %s33, [#allocation6]
    $region9: #{tpu_custom_call.1} parent=1 // pred_fallthru
      _
    // Predicated region
    $region10: #{tpu_custom_call.1} parent=1 // pred_check
      _
    $region11: #{tpu_custom_call.1} parent=1 // pred_check_branch
      %37 = sbr.rel (0) target = $region13
    $region12: #{tpu_custom_call.1} parent=1 // pred_region
      %s39 = ssub.s32 24576, 24576
      %40 = vsyncadd [#allocation6], %s39
      %s41 = sshll.u32 [#allocation7], 4
      %s42 = int_to_ptr.vmem [resolvable:$true] %s41
      %47 = dma.hbm_to_vmem [thread:$0]  %s2, 24576, %s42, [#allocation6], 64, 64, 4
    $region13: #{tpu_custom_call.1} parent=1 // pred_fallthru
      _
    // Predicated region
    $region14: #{tpu_custom_call.1} parent=1 // pred_check
      _
    $region15: #{tpu_custom_call.1} parent=1 // pred_check_branch
      %49 = sbr.rel (0) target = $region17
    $region16: #{tpu_custom_call.1} parent=1 // pred_region
      %s51 = ssub.s32 8192, 8192
      %52 = vsyncadd [#allocation9], %s51
      %s53 = sshll.u32 [#allocation8], 4
      %s54 = int_to_ptr.vmem [resolvable:$true] %s53
      %59 = dma.hbm_to_vmem [thread:$0]  %s3, 8192, %s54, [#allocation9], 64, 64, 4
    $region17: #{tpu_custom_call.1} parent=1 // pred_fallthru
      _
    // Predicated region
    $region18: #{tpu_custom_call.1} parent=1 // pred_check
      _
    $region19: #{tpu_custom_call.1} parent=1 // pred_check_branch
      %61 = sbr.rel (0) target = $region21
    $region20: #{tpu_custom_call.1} parent=1 // pred_region
      _
    $region21: #{tpu_custom_call.1} parent=1 // pred_fallthru
      _
    // Predicated region
    $region22: #{tpu_custom_call.1} parent=1 // pred_check
      _
    $region23: #{tpu_custom_call.1} parent=1 // pred_check_branch
      %63 = sbr.rel (0) target = $region25
    $region24: #{tpu_custom_call.1} parent=1 // pred_region
      %s65 = ssub.s32 1024, 1024
      %66 = vsyncadd [#allocation9], %s65
      %s67 = sshll.u32 [#allocation10], 4
      %s68 = int_to_ptr.vmem [resolvable:$true] %s67
      %73 = dma.hbm_to_vmem [thread:$0]  %s5, 1024, %s68, [#allocation9], 64, 64, 4
    $region25: #{tpu_custom_call.1} parent=1 // pred_fallthru
      _
    // Predicated region
    $region26: #{tpu_custom_call.1} parent=1 // pred_check
      _
    $region27: #{tpu_custom_call.1} parent=1 // pred_check_branch
      %75 = sbr.rel (0) target = $region29
    $region28: #{tpu_custom_call.1} parent=1 // pred_region
      _
    $region29: #{tpu_custom_call.1} parent=1 // pred_fallthru
      _
    // Predicated region
    $region30: #{tpu_custom_call.1} parent=1 // pred_check
      _
    $region31: #{tpu_custom_call.1} parent=1 // pred_check_branch
      %77 = sbr.rel (0) target = $region33
    $region32: #{tpu_custom_call.1} parent=1 // pred_region
      %78 = dma.done [#allocation3], 1536
    $region33: #{tpu_custom_call.1} parent=1 // pred_fallthru
      _
    // Predicated region
    $region34: #{tpu_custom_call.1} parent=1 // pred_check
      _
    $region35: #{tpu_custom_call.1} parent=1 // pred_check_branch
      %80 = sbr.rel (0) target = $region37
    $region36: #{tpu_custom_call.1} parent=1 // pred_region
      %81 = dma.done [#allocation6], 512
    $region37: #{tpu_custom_call.1} parent=1 // pred_fallthru
      _
    // Predicated region
    $region38: #{tpu_custom_call.1} parent=1 // pred_check
      _
    $region39: #{tpu_custom_call.1} parent=1 // pred_check_branch
      %83 = sbr.rel (0) target = $region41
    $region40: #{tpu_custom_call.1} parent=1 // pred_region
      %84 = dma.done [#allocation6], 24576
    $region41: #{tpu_custom_call.1} parent=1 // pred_fallthru
      _
    // Predicated region
    $region42: #{tpu_custom_call.1} parent=1 // pred_check
      _
    $region43: #{tpu_custom_call.1} parent=1 // pred_check_branch
      %86 = sbr.rel (0) target = $region45
    $region44: #{tpu_custom_call.1} parent=1 // pred_region
      %87 = dma.done [#allocation9], 8192
    $region45: #{tpu_custom_call.1} parent=1 // pred_fallthru
      _
    // Predicated region
    $region46: #{tpu_custom_call.1} parent=1 // pred_check
      _
    $region47: #{tpu_custom_call.1} parent=1 // pred_check_branch
      %89 = sbr.rel (0) target = $region49
    $region48: #{tpu_custom_call.1} parent=1 // pred_region
      %90 = dma.done [#allocation9], 1024
    $region49: #{tpu_custom_call.1} parent=1 // pred_fallthru
      _
    %v92 = vld [vmem:[#allocation2] sm:$0xff]
    %v93 = vld [vmem:[#allocation2 + $0x8] sm:$0xff]
    %v94 = vld [vmem:[#allocation2 + $0x10] sm:$0xff]
    %v95 = vld [vmem:[#allocation2 + $0x18] sm:$0xff]
    %v96 = vld [vmem:[#allocation2 + $0x20] sm:$0xff]
    %v97 = vld [vmem:[#allocation2 + $0x28] sm:$0xff]
    %v98 = vld [vmem:[#allocation2 + $0x30] sm:$0xff]
    %v99 = vld [vmem:[#allocation2 + $0x38] sm:$0xff]
    %v100 = vld [vmem:[#allocation2 + $0x40] sm:$0xff]
    %v101 = vld [vmem:[#allocation2 + $0x48] sm:$0xff]
    %v102 = vld [vmem:[#allocation2 + $0x50] sm:$0xff]
    %v103 = vld [vmem:[#allocation2 + $0x58] sm:$0xff]
    %v116 = vcombine.high %v92, %v92
    %v117 = vcombine.high %v93, %v93
    %v118 = vcombine.high %v94, %v94
    %v119 = vcombine.high %v95, %v95
    %v120 = vcombine.high %v96, %v96
    %v121 = vcombine.high %v97, %v97
    %v122 = vcombine.high %v98, %v98
    %v123 = vcombine.high %v99, %v99
    %v124 = vcombine.high %v100, %v100
    %v125 = vcombine.high %v101, %v101
    %v126 = vcombine.high %v102, %v102
    %v127 = vcombine.high %v103, %v103
    %v140 = vpack.c.bf16 %v92, %v92
    %v141 = vpack.c.bf16 %v116, %v116
    %v142 = vpack.c.bf16 %v93, %v93
    %v143 = vpack.c.bf16 %v117, %v117
    %v144 = vpack.c.bf16 %v94, %v94
    %v145 = vpack.c.bf16 %v118, %v118
    %v146 = vpack.c.bf16 %v95, %v95
    %v147 = vpack.c.bf16 %v119, %v119
    %v148 = vpack.c.bf16 %v96, %v96
    %v149 = vpack.c.bf16 %v120, %v120
    %v150 = vpack.c.bf16 %v97, %v97
    %v151 = vpack.c.bf16 %v121, %v121
    %v152 = vpack.c.bf16 %v98, %v98
    %v153 = vpack.c.bf16 %v122, %v122
    %v154 = vpack.c.bf16 %v99, %v99
    %v155 = vpack.c.bf16 %v123, %v123
    %v156 = vpack.c.bf16 %v100, %v100
    %v157 = vpack.c.bf16 %v124, %v124
    %v158 = vpack.c.bf16 %v101, %v101
    %v159 = vpack.c.bf16 %v125, %v125
    %v160 = vpack.c.bf16 %v102, %v102
    %v161 = vpack.c.bf16 %v126, %v126
    %v162 = vpack.c.bf16 %v103, %v103
    %v163 = vpack.c.bf16 %v127, %v127
    %v164 = vld [vmem:[#allocation5] sm:$0xff]
    %v165 = vld [vmem:[#allocation5 + $0x8] sm:$0xff]
    %v166 = vld [vmem:[#allocation5 + $0x10] sm:$0xff]
    %v167 = vld [vmem:[#allocation5 + $0x18] sm:$0xff]
    %v172 = vcombine.high %v164, %v164
    %v173 = vcombine.high %v165, %v165
    %v174 = vcombine.high %v166, %v166
    %v175 = vcombine.high %v167, %v167
    %v180 = vpack.c.bf16 %v164, %v164
    %v181 = vpack.c.bf16 %v172, %v172
    %v182 = vpack.c.bf16 %v165, %v165
    %v183 = vpack.c.bf16 %v173, %v173
    %v184 = vpack.c.bf16 %v166, %v166
    %v185 = vpack.c.bf16 %v174, %v174
    %v186 = vpack.c.bf16 %v167, %v167
    %v187 = vpack.c.bf16 %v175, %v175
    %v188 = vld [vmem:[#allocation7] sm:$0xf]
    %v189 = vld [vmem:[#allocation7 + $0x4] sm:$0xf]
    %v190 = vld [vmem:[#allocation7 + $0x8] sm:$0xf]
    %v191 = vld [vmem:[#allocation7 + $0xc] sm:$0xf]
    %v192 = vld [vmem:[#allocation7 + $0x10] sm:$0xf]
    %v193 = vld [vmem:[#allocation7 + $0x14] sm:$0xf]
    %v194 = vld [vmem:[#allocation7 + $0x18] sm:$0xf]
    %v195 = vld [vmem:[#allocation7 + $0x1c] sm:$0xf]
    %v196 = vld [vmem:[#allocation7 + $0x20] sm:$0xf]
    %v197 = vld [vmem:[#allocation7 + $0x24] sm:$0xf]
    %v198 = vld [vmem:[#allocation7 + $0x28] sm:$0xf]
    %v199 = vld [vmem:[#allocation7 + $0x2c] sm:$0xf]
    %v200 = vld [vmem:[#allocation7 + $0x30] sm:$0xf]
    %v201 = vld [vmem:[#allocation7 + $0x34] sm:$0xf]
    %v202 = vld [vmem:[#allocation7 + $0x38] sm:$0xf]
    %v203 = vld [vmem:[#allocation7 + $0x3c] sm:$0xf]
    %v204 = vld [vmem:[#allocation7 + $0x40] sm:$0xf]
    %v205 = vld [vmem:[#allocation7 + $0x44] sm:$0xf]
    %v206 = vld [vmem:[#allocation7 + $0x48] sm:$0xf]
    %v207 = vld [vmem:[#allocation7 + $0x4c] sm:$0xf]
    %v208 = vld [vmem:[#allocation7 + $0x50] sm:$0xf]
    %v209 = vld [vmem:[#allocation7 + $0x54] sm:$0xf]
    %v210 = vld [vmem:[#allocation7 + $0x58] sm:$0xf]
    %v211 = vld [vmem:[#allocation7 + $0x5c] sm:$0xf]
    %v212 = vld [vmem:[#allocation7 + $0x60] sm:$0xf]
    %v213 = vld [vmem:[#allocation7 + $0x64] sm:$0xf]
    %v214 = vld [vmem:[#allocation7 + $0x68] sm:$0xf]
    %v215 = vld [vmem:[#allocation7 + $0x6c] sm:$0xf]
    %v216 = vld [vmem:[#allocation7 + $0x70] sm:$0xf]
    %v217 = vld [vmem:[#allocation7 + $0x74] sm:$0xf]
    %v218 = vld [vmem:[#allocation7 + $0x78] sm:$0xf]
    %v219 = vld [vmem:[#allocation7 + $0x7c] sm:$0xf]
    %v220 = vld [vmem:[#allocation7 + $0x80] sm:$0xf]
    %v221 = vld [vmem:[#allocation7 + $0x84] sm:$0xf]
    %v222 = vld [vmem:[#allocation7 + $0x88] sm:$0xf]
    %v223 = vld [vmem:[#allocation7 + $0x8c] sm:$0xf]
    %v224 = vld [vmem:[#allocation7 + $0x90] sm:$0xf]
    %v225 = vld [vmem:[#allocation7 + $0x94] sm:$0xf]
    %v226 = vld [vmem:[#allocation7 + $0x98] sm:$0xf]
    %v227 = vld [vmem:[#allocation7 + $0x9c] sm:$0xf]
    %v228 = vld [vmem:[#allocation7 + $0xa0] sm:$0xf]
    %v229 = vld [vmem:[#allocation7 + $0xa4] sm:$0xf]
    %v230 = vld [vmem:[#allocation7 + $0xa8] sm:$0xf]
    %v231 = vld [vmem:[#allocation7 + $0xac] sm:$0xf]
    %v232 = vld [vmem:[#allocation7 + $0xb0] sm:$0xf]
    %v233 = vld [vmem:[#allocation7 + $0xb4] sm:$0xf]
    %v234 = vld [vmem:[#allocation7 + $0xb8] sm:$0xf]
    %v235 = vld [vmem:[#allocation7 + $0xbc] sm:$0xf]
    %v236 = vld [vmem:[#allocation7 + $0xc0] sm:$0xf]
    %v237 = vld [vmem:[#allocation7 + $0xc4] sm:$0xf]
    %v238 = vld [vmem:[#allocation7 + $0xc8] sm:$0xf]
    %v239 = vld [vmem:[#allocation7 + $0xcc] sm:$0xf]
    %v240 = vld [vmem:[#allocation7 + $0xd0] sm:$0xf]
    %v241 = vld [vmem:[#allocation7 + $0xd4] sm:$0xf]
    %v242 = vld [vmem:[#allocation7 + $0xd8] sm:$0xf]
    %v243 = vld [vmem:[#allocation7 + $0xdc] sm:$0xf]
    %v244 = vld [vmem:[#allocation7 + $0xe0] sm:$0xf]
    %v245 = vld [vmem:[#allocation7 + $0xe4] sm:$0xf]
    %v246 = vld [vmem:[#allocation7 + $0xe8] sm:$0xf]
    %v247 = vld [vmem:[#allocation7 + $0xec] sm:$0xf]
    %v248 = vld [vmem:[#allocation7 + $0xf0] sm:$0xf]
    %v249 = vld [vmem:[#allocation7 + $0xf4] sm:$0xf]
    %v250 = vld [vmem:[#allocation7 + $0xf8] sm:$0xf]
    %v251 = vld [vmem:[#allocation7 + $0xfc] sm:$0xf]
    %v252 = vld [vmem:[#allocation7 + $0x100] sm:$0xf]
    %v253 = vld [vmem:[#allocation7 + $0x104] sm:$0xf]
    %v254 = vld [vmem:[#allocation7 + $0x108] sm:$0xf]
    %v255 = vld [vmem:[#allocation7 + $0x10c] sm:$0xf]
    %v256 = vld [vmem:[#allocation7 + $0x110] sm:$0xf]
    %v257 = vld [vmem:[#allocation7 + $0x114] sm:$0xf]
    %v258 = vld [vmem:[#allocation7 + $0x118] sm:$0xf]
    %v259 = vld [vmem:[#allocation7 + $0x11c] sm:$0xf]
    %v260 = vld [vmem:[#allocation7 + $0x120] sm:$0xf]
    %v261 = vld [vmem:[#allocation7 + $0x124] sm:$0xf]
    %v262 = vld [vmem:[#allocation7 + $0x128] sm:$0xf]
    %v263 = vld [vmem:[#allocation7 + $0x12c] sm:$0xf]
    %v264 = vld [vmem:[#allocation7 + $0x130] sm:$0xf]
    %v265 = vld [vmem:[#allocation7 + $0x134] sm:$0xf]
    %v266 = vld [vmem:[#allocation7 + $0x138] sm:$0xf]
    %v267 = vld [vmem:[#allocation7 + $0x13c] sm:$0xf]
    %v268 = vld [vmem:[#allocation7 + $0x140] sm:$0xf]
    %v269 = vld [vmem:[#allocation7 + $0x144] sm:$0xf]
    %v270 = vld [vmem:[#allocation7 + $0x148] sm:$0xf]
    %v271 = vld [vmem:[#allocation7 + $0x14c] sm:$0xf]
    %v272 = vld [vmem:[#allocation7 + $0x150] sm:$0xf]
    %v273 = vld [vmem:[#allocation7 + $0x154] sm:$0xf]
    %v274 = vld [vmem:[#allocation7 + $0x158] sm:$0xf]
    %v275 = vld [vmem:[#allocation7 + $0x15c] sm:$0xf]
    %v276 = vld [vmem:[#allocation7 + $0x160] sm:$0xf]
    %v277 = vld [vmem:[#allocation7 + $0x164] sm:$0xf]
    %v278 = vld [vmem:[#allocation7 + $0x168] sm:$0xf]
    %v279 = vld [vmem:[#allocation7 + $0x16c] sm:$0xf]
    %v280 = vld [vmem:[#allocation7 + $0x170] sm:$0xf]
    %v281 = vld [vmem:[#allocation7 + $0x174] sm:$0xf]
    %v282 = vld [vmem:[#allocation7 + $0x178] sm:$0xf]
    %v283 = vld [vmem:[#allocation7 + $0x17c] sm:$0xf]
    %v284 = vld [vmem:[#allocation7 + $0x180] sm:$0xf]
    %v285 = vld [vmem:[#allocation7 + $0x184] sm:$0xf]
    %v286 = vld [vmem:[#allocation7 + $0x188] sm:$0xf]
    %v287 = vld [vmem:[#allocation7 + $0x18c] sm:$0xf]
    %v288 = vld [vmem:[#allocation7 + $0x190] sm:$0xf]
    %v289 = vld [vmem:[#allocation7 + $0x194] sm:$0xf]
    %v290 = vld [vmem:[#allocation7 + $0x198] sm:$0xf]
    %v291 = vld [vmem:[#allocation7 + $0x19c] sm:$0xf]
    %v292 = vld [vmem:[#allocation7 + $0x1a0] sm:$0xf]
    %v293 = vld [vmem:[#allocation7 + $0x1a4] sm:$0xf]
    %v294 = vld [vmem:[#allocation7 + $0x1a8] sm:$0xf]
    %v295 = vld [vmem:[#allocation7 + $0x1ac] sm:$0xf]
    %v296 = vld [vmem:[#allocation7 + $0x1b0] sm:$0xf]
    %v297 = vld [vmem:[#allocation7 + $0x1b4] sm:$0xf]
    %v298 = vld [vmem:[#allocation7 + $0x1b8] sm:$0xf]
    %v299 = vld [vmem:[#allocation7 + $0x1bc] sm:$0xf]
    %v300 = vld [vmem:[#allocation7 + $0x1c0] sm:$0xf]
    %v301 = vld [vmem:[#allocation7 + $0x1c4] sm:$0xf]
    %v302 = vld [vmem:[#allocation7 + $0x1c8] sm:$0xf]
    %v303 = vld [vmem:[#allocation7 + $0x1cc] sm:$0xf]
    %v304 = vld [vmem:[#allocation7 + $0x1d0] sm:$0xf]
    %v305 = vld [vmem:[#allocation7 + $0x1d4] sm:$0xf]
    %v306 = vld [vmem:[#allocation7 + $0x1d8] sm:$0xf]
    %v307 = vld [vmem:[#allocation7 + $0x1dc] sm:$0xf]
    %v308 = vld [vmem:[#allocation7 + $0x1e0] sm:$0xf]
    %v309 = vld [vmem:[#allocation7 + $0x1e4] sm:$0xf]
    %v310 = vld [vmem:[#allocation7 + $0x1e8] sm:$0xf]
    %v311 = vld [vmem:[#allocation7 + $0x1ec] sm:$0xf]
    %v312 = vld [vmem:[#allocation7 + $0x1f0] sm:$0xf]
    %v313 = vld [vmem:[#allocation7 + $0x1f4] sm:$0xf]
    %v314 = vld [vmem:[#allocation7 + $0x1f8] sm:$0xf]
    %v315 = vld [vmem:[#allocation7 + $0x1fc] sm:$0xf]
    %v316 = vld [vmem:[#allocation7 + $0x200] sm:$0xf]
    %v317 = vld [vmem:[#allocation7 + $0x204] sm:$0xf]
    %v318 = vld [vmem:[#allocation7 + $0x208] sm:$0xf]
    %v319 = vld [vmem:[#allocation7 + $0x20c] sm:$0xf]
    %v320 = vld [vmem:[#allocation7 + $0x210] sm:$0xf]
    %v321 = vld [vmem:[#allocation7 + $0x214] sm:$0xf]
    %v322 = vld [vmem:[#allocation7 + $0x218] sm:$0xf]
    %v323 = vld [vmem:[#allocation7 + $0x21c] sm:$0xf]
    %v324 = vld [vmem:[#allocation7 + $0x220] sm:$0xf]
    %v325 = vld [vmem:[#allocation7 + $0x224] sm:$0xf]
    %v326 = vld [vmem:[#allocation7 + $0x228] sm:$0xf]
    %v327 = vld [vmem:[#allocation7 + $0x22c] sm:$0xf]
    %v328 = vld [vmem:[#allocation7 + $0x230] sm:$0xf]
    %v329 = vld [vmem:[#allocation7 + $0x234] sm:$0xf]
    %v330 = vld [vmem:[#allocation7 + $0x238] sm:$0xf]
    %v331 = vld [vmem:[#allocation7 + $0x23c] sm:$0xf]
    %v332 = vld [vmem:[#allocation7 + $0x240] sm:$0xf]
    %v333 = vld [vmem:[#allocation7 + $0x244] sm:$0xf]
    %v334 = vld [vmem:[#allocation7 + $0x248] sm:$0xf]
    %v335 = vld [vmem:[#allocation7 + $0x24c] sm:$0xf]
    %v336 = vld [vmem:[#allocation7 + $0x250] sm:$0xf]
    %v337 = vld [vmem:[#allocation7 + $0x254] sm:$0xf]
    %v338 = vld [vmem:[#allocation7 + $0x258] sm:$0xf]
    %v339 = vld [vmem:[#allocation7 + $0x25c] sm:$0xf]
    %v340 = vld [vmem:[#allocation7 + $0x260] sm:$0xf]
    %v341 = vld [vmem:[#allocation7 + $0x264] sm:$0xf]
    %v342 = vld [vmem:[#allocation7 + $0x268] sm:$0xf]
    %v343 = vld [vmem:[#allocation7 + $0x26c] sm:$0xf]
    %v344 = vld [vmem:[#allocation7 + $0x270] sm:$0xf]
    %v345 = vld [vmem:[#allocation7 + $0x274] sm:$0xf]
    %v346 = vld [vmem:[#allocation7 + $0x278] sm:$0xf]
    %v347 = vld [vmem:[#allocation7 + $0x27c] sm:$0xf]
    %v348 = vld [vmem:[#allocation7 + $0x280] sm:$0xf]
    %v349 = vld [vmem:[#allocation7 + $0x284] sm:$0xf]
    %v350 = vld [vmem:[#allocation7 + $0x288] sm:$0xf]
    %v351 = vld [vmem:[#allocation7 + $0x28c] sm:$0xf]
    %v352 = vld [vmem:[#allocation7 + $0x290] sm:$0xf]
    %v353 = vld [vmem:[#allocation7 + $0x294] sm:$0xf]
    %v354 = vld [vmem:[#allocation7 + $0x298] sm:$0xf]
    %v355 = vld [vmem:[#allocation7 + $0x29c] sm:$0xf]
    %v356 = vld [vmem:[#allocation7 + $0x2a0] sm:$0xf]
    %v357 = vld [vmem:[#allocation7 + $0x2a4] sm:$0xf]
    %v358 = vld [vmem:[#allocation7 + $0x2a8] sm:$0xf]
    %v359 = vld [vmem:[#allocation7 + $0x2ac] sm:$0xf]
    %v360 = vld [vmem:[#allocation7 + $0x2b0] sm:$0xf]
    %v361 = vld [vmem:[#allocation7 + $0x2b4] sm:$0xf]
    %v362 = vld [vmem:[#allocation7 + $0x2b8] sm:$0xf]
    %v363 = vld [vmem:[#allocation7 + $0x2bc] sm:$0xf]
    %v364 = vld [vmem:[#allocation7 + $0x2c0] sm:$0xf]
    %v365 = vld [vmem:[#allocation7 + $0x2c4] sm:$0xf]
    %v366 = vld [vmem:[#allocation7 + $0x2c8] sm:$0xf]
    %v367 = vld [vmem:[#allocation7 + $0x2cc] sm:$0xf]
    %v368 = vld [vmem:[#allocation7 + $0x2d0] sm:$0xf]
    %v369 = vld [vmem:[#allocation7 + $0x2d4] sm:$0xf]
    %v370 = vld [vmem:[#allocation7 + $0x2d8] sm:$0xf]
    %v371 = vld [vmem:[#allocation7 + $0x2dc] sm:$0xf]
    %v372 = vld [vmem:[#allocation7 + $0x2e0] sm:$0xf]
    %v373 = vld [vmem:[#allocation7 + $0x2e4] sm:$0xf]
    %v374 = vld [vmem:[#allocation7 + $0x2e8] sm:$0xf]
    %v375 = vld [vmem:[#allocation7 + $0x2ec] sm:$0xf]
    %v376 = vld [vmem:[#allocation7 + $0x2f0] sm:$0xf]
    %v377 = vld [vmem:[#allocation7 + $0x2f4] sm:$0xf]
    %v378 = vld [vmem:[#allocation7 + $0x2f8] sm:$0xf]
    %v379 = vld [vmem:[#allocation7 + $0x2fc] sm:$0xf]
    %v380 = vld [vmem:[#allocation7 + $0x300] sm:$0xf]
    %v381 = vld [vmem:[#allocation7 + $0x304] sm:$0xf]
    %v382 = vld [vmem:[#allocation7 + $0x308] sm:$0xf]
    %v383 = vld [vmem:[#allocation7 + $0x30c] sm:$0xf]
    %v384 = vld [vmem:[#allocation7 + $0x310] sm:$0xf]
    %v385 = vld [vmem:[#allocation7 + $0x314] sm:$0xf]
    %v386 = vld [vmem:[#allocation7 + $0x318] sm:$0xf]
    %v387 = vld [vmem:[#allocation7 + $0x31c] sm:$0xf]
    %v388 = vld [vmem:[#allocation7 + $0x320] sm:$0xf]
    %v389 = vld [vmem:[#allocation7 + $0x324] sm:$0xf]
    %v390 = vld [vmem:[#allocation7 + $0x328] sm:$0xf]
    %v391 = vld [vmem:[#allocation7 + $0x32c] sm:$0xf]
    %v392 = vld [vmem:[#allocation7 + $0x330] sm:$0xf]
    %v393 = vld [vmem:[#allocation7 + $0x334] sm:$0xf]
    %v394 = vld [vmem:[#allocation7 + $0x338] sm:$0xf]
    %v395 = vld [vmem:[#allocation7 + $0x33c] sm:$0xf]
    %v396 = vld [vmem:[#allocation7 + $0x340] sm:$0xf]
    %v397 = vld [vmem:[#allocation7 + $0x344] sm:$0xf]
    %v398 = vld [vmem:[#allocation7 + $0x348] sm:$0xf]
    %v399 = vld [vmem:[#allocation7 + $0x34c] sm:$0xf]
    %v400 = vld [vmem:[#allocation7 + $0x350] sm:$0xf]
    %v401 = vld [vmem:[#allocation7 + $0x354] sm:$0xf]
    %v402 = vld [vmem:[#allocation7 + $0x358] sm:$0xf]
    %v403 = vld [vmem:[#allocation7 + $0x35c] sm:$0xf]
    %v404 = vld [vmem:[#allocation7 + $0x360] sm:$0xf]
    %v405 = vld [vmem:[#allocation7 + $0x364] sm:$0xf]
    %v406 = vld [vmem:[#allocation7 + $0x368] sm:$0xf]
    %v407 = vld [vmem:[#allocation7 + $0x36c] sm:$0xf]
    %v408 = vld [vmem:[#allocation7 + $0x370] sm:$0xf]
    %v409 = vld [vmem:[#allocation7 + $0x374] sm:$0xf]
    %v410 = vld [vmem:[#allocation7 + $0x378] sm:$0xf]
    %v411 = vld [vmem:[#allocation7 + $0x37c] sm:$0xf]
    %v412 = vld [vmem:[#allocation7 + $0x380] sm:$0xf]
    %v413 = vld [vmem:[#allocation7 + $0x384] sm:$0xf]
    %v414 = vld [vmem:[#allocation7 + $0x388] sm:$0xf]
    %v415 = vld [vmem:[#allocation7 + $0x38c] sm:$0xf]
    %v416 = vld [vmem:[#allocation7 + $0x390] sm:$0xf]
    %v417 = vld [vmem:[#allocation7 + $0x394] sm:$0xf]
    %v418 = vld [vmem:[#allocation7 + $0x398] sm:$0xf]
    %v419 = vld [vmem:[#allocation7 + $0x39c] sm:$0xf]
    %v420 = vld [vmem:[#allocation7 + $0x3a0] sm:$0xf]
    %v421 = vld [vmem:[#allocation7 + $0x3a4] sm:$0xf]
    %v422 = vld [vmem:[#allocation7 + $0x3a8] sm:$0xf]
    %v423 = vld [vmem:[#allocation7 + $0x3ac] sm:$0xf]
    %v424 = vld [vmem:[#allocation7 + $0x3b0] sm:$0xf]
    %v425 = vld [vmem:[#allocation7 + $0x3b4] sm:$0xf]
    %v426 = vld [vmem:[#allocation7 + $0x3b8] sm:$0xf]
    %v427 = vld [vmem:[#allocation7 + $0x3bc] sm:$0xf]
    %v428 = vld [vmem:[#allocation7 + $0x3c0] sm:$0xf]
    %v429 = vld [vmem:[#allocation7 + $0x3c4] sm:$0xf]
    %v430 = vld [vmem:[#allocation7 + $0x3c8] sm:$0xf]
    %v431 = vld [vmem:[#allocation7 + $0x3cc] sm:$0xf]
    %v432 = vld [vmem:[#allocation7 + $0x3d0] sm:$0xf]
    %v433 = vld [vmem:[#allocation7 + $0x3d4] sm:$0xf]
    %v434 = vld [vmem:[#allocation7 + $0x3d8] sm:$0xf]
    %v435 = vld [vmem:[#allocation7 + $0x3dc] sm:$0xf]
    %v436 = vld [vmem:[#allocation7 + $0x3e0] sm:$0xf]
    %v437 = vld [vmem:[#allocation7 + $0x3e4] sm:$0xf]
    %v438 = vld [vmem:[#allocation7 + $0x3e8] sm:$0xf]
    %v439 = vld [vmem:[#allocation7 + $0x3ec] sm:$0xf]
    %v440 = vld [vmem:[#allocation7 + $0x3f0] sm:$0xf]
    %v441 = vld [vmem:[#allocation7 + $0x3f4] sm:$0xf]
    %v442 = vld [vmem:[#allocation7 + $0x3f8] sm:$0xf]
    %v443 = vld [vmem:[#allocation7 + $0x3fc] sm:$0xf]
    %v444 = vld [vmem:[#allocation7 + $0x400] sm:$0xf]
    %v445 = vld [vmem:[#allocation7 + $0x404] sm:$0xf]
    %v446 = vld [vmem:[#allocation7 + $0x408] sm:$0xf]
    %v447 = vld [vmem:[#allocation7 + $0x40c] sm:$0xf]
    %v448 = vld [vmem:[#allocation7 + $0x410] sm:$0xf]
    %v449 = vld [vmem:[#allocation7 + $0x414] sm:$0xf]
    %v450 = vld [vmem:[#allocation7 + $0x418] sm:$0xf]
    %v451 = vld [vmem:[#allocation7 + $0x41c] sm:$0xf]
    %v452 = vld [vmem:[#allocation7 + $0x420] sm:$0xf]
    %v453 = vld [vmem:[#allocation7 + $0x424] sm:$0xf]
    %v454 = vld [vmem:[#allocation7 + $0x428] sm:$0xf]
    %v455 = vld [vmem:[#allocation7 + $0x42c] sm:$0xf]
    %v456 = vld [vmem:[#allocation7 + $0x430] sm:$0xf]
    %v457 = vld [vmem:[#allocation7 + $0x434] sm:$0xf]
    %v458 = vld [vmem:[#allocation7 + $0x438] sm:$0xf]
    %v459 = vld [vmem:[#allocation7 + $0x43c] sm:$0xf]
    %v460 = vld [vmem:[#allocation7 + $0x440] sm:$0xf]
    %v461 = vld [vmem:[#allocation7 + $0x444] sm:$0xf]
    %v462 = vld [vmem:[#allocation7 + $0x448] sm:$0xf]
    %v463 = vld [vmem:[#allocation7 + $0x44c] sm:$0xf]
    %v464 = vld [vmem:[#allocation7 + $0x450] sm:$0xf]
    %v465 = vld [vmem:[#allocation7 + $0x454] sm:$0xf]
    %v466 = vld [vmem:[#allocation7 + $0x458] sm:$0xf]
    %v467 = vld [vmem:[#allocation7 + $0x45c] sm:$0xf]
    %v468 = vld [vmem:[#allocation7 + $0x460] sm:$0xf]
    %v469 = vld [vmem:[#allocation7 + $0x464] sm:$0xf]
    %v470 = vld [vmem:[#allocation7 + $0x468] sm:$0xf]
    %v471 = vld [vmem:[#allocation7 + $0x46c] sm:$0xf]
    %v472 = vld [vmem:[#allocation7 + $0x470] sm:$0xf]
    %v473 = vld [vmem:[#allocation7 + $0x474] sm:$0xf]
    %v474 = vld [vmem:[#allocation7 + $0x478] sm:$0xf]
    %v475 = vld [vmem:[#allocation7 + $0x47c] sm:$0xf]
    %v476 = vld [vmem:[#allocation7 + $0x480] sm:$0xf]
    %v477 = vld [vmem:[#allocation7 + $0x484] sm:$0xf]
    %v478 = vld [vmem:[#allocation7 + $0x488] sm:$0xf]
    %v479 = vld [vmem:[#allocation7 + $0x48c] sm:$0xf]
    %v480 = vld [vmem:[#allocation7 + $0x490] sm:$0xf]
    %v481 = vld [vmem:[#allocation7 + $0x494] sm:$0xf]
    %v482 = vld [vmem:[#allocation7 + $0x498] sm:$0xf]
    %v483 = vld [vmem:[#allocation7 + $0x49c] sm:$0xf]
    %v484 = vld [vmem:[#allocation7 + $0x4a0] sm:$0xf]
    %v485 = vld [vmem:[#allocation7 + $0x4a4] sm:$0xf]
    %v486 = vld [vmem:[#allocation7 + $0x4a8] sm:$0xf]
    %v487 = vld [vmem:[#allocation7 + $0x4ac] sm:$0xf]
    %v488 = vld [vmem:[#allocation7 + $0x4b0] sm:$0xf]
    %v489 = vld [vmem:[#allocation7 + $0x4b4] sm:$0xf]
    %v490 = vld [vmem:[#allocation7 + $0x4b8] sm:$0xf]
    %v491 = vld [vmem:[#allocation7 + $0x4bc] sm:$0xf]
    %v492 = vld [vmem:[#allocation7 + $0x4c0] sm:$0xf]
    %v493 = vld [vmem:[#allocation7 + $0x4c4] sm:$0xf]
    %v494 = vld [vmem:[#allocation7 + $0x4c8] sm:$0xf]
    %v495 = vld [vmem:[#allocation7 + $0x4cc] sm:$0xf]
    %v496 = vld [vmem:[#allocation7 + $0x4d0] sm:$0xf]
    %v497 = vld [vmem:[#allocation7 + $0x4d4] sm:$0xf]
    %v498 = vld [vmem:[#allocation7 + $0x4d8] sm:$0xf]
    %v499 = vld [vmem:[#allocation7 + $0x4dc] sm:$0xf]
    %v500 = vld [vmem:[#allocation7 + $0x4e0] sm:$0xf]
    %v501 = vld [vmem:[#allocation7 + $0x4e4] sm:$0xf]
    %v502 = vld [vmem:[#allocation7 + $0x4e8] sm:$0xf]
    %v503 = vld [vmem:[#allocation7 + $0x4ec] sm:$0xf]
    %v504 = vld [vmem:[#allocation7 + $0x4f0] sm:$0xf]
    %v505 = vld [vmem:[#allocation7 + $0x4f4] sm:$0xf]
    %v506 = vld [vmem:[#allocation7 + $0x4f8] sm:$0xf]
    %v507 = vld [vmem:[#allocation7 + $0x4fc] sm:$0xf]
    %v508 = vld [vmem:[#allocation7 + $0x500] sm:$0xf]
    %v509 = vld [vmem:[#allocation7 + $0x504] sm:$0xf]
    %v510 = vld [vmem:[#allocation7 + $0x508] sm:$0xf]
    %v511 = vld [vmem:[#allocation7 + $0x50c] sm:$0xf]
    %v512 = vld [vmem:[#allocation7 + $0x510] sm:$0xf]
    %v513 = vld [vmem:[#allocation7 + $0x514] sm:$0xf]
    %v514 = vld [vmem:[#allocation7 + $0x518] sm:$0xf]
    %v515 = vld [vmem:[#allocation7 + $0x51c] sm:$0xf]
    %v516 = vld [vmem:[#allocation7 + $0x520] sm:$0xf]
    %v517 = vld [vmem:[#allocation7 + $0x524] sm:$0xf]
    %v518 = vld [vmem:[#allocation7 + $0x528] sm:$0xf]
    %v519 = vld [vmem:[#allocation7 + $0x52c] sm:$0xf]
    %v520 = vld [vmem:[#allocation7 + $0x530] sm:$0xf]
    %v521 = vld [vmem:[#allocation7 + $0x534] sm:$0xf]
    %v522 = vld [vmem:[#allocation7 + $0x538] sm:$0xf]
    %v523 = vld [vmem:[#allocation7 + $0x53c] sm:$0xf]
    %v524 = vld [vmem:[#allocation7 + $0x540] sm:$0xf]
    %v525 = vld [vmem:[#allocation7 + $0x544] sm:$0xf]
    %v526 = vld [vmem:[#allocation7 + $0x548] sm:$0xf]
    %v527 = vld [vmem:[#allocation7 + $0x54c] sm:$0xf]
    %v528 = vld [vmem:[#allocation7 + $0x550] sm:$0xf]
    %v529 = vld [vmem:[#allocation7 + $0x554] sm:$0xf]
    %v530 = vld [vmem:[#allocation7 + $0x558] sm:$0xf]
    %v531 = vld [vmem:[#allocation7 + $0x55c] sm:$0xf]
    %v532 = vld [vmem:[#allocation7 + $0x560] sm:$0xf]
    %v533 = vld [vmem:[#allocation7 + $0x564] sm:$0xf]
    %v534 = vld [vmem:[#allocation7 + $0x568] sm:$0xf]
    %v535 = vld [vmem:[#allocation7 + $0x56c] sm:$0xf]
    %v536 = vld [vmem:[#allocation7 + $0x570] sm:$0xf]
    %v537 = vld [vmem:[#allocation7 + $0x574] sm:$0xf]
    %v538 = vld [vmem:[#allocation7 + $0x578] sm:$0xf]
    %v539 = vld [vmem:[#allocation7 + $0x57c] sm:$0xf]
    %v540 = vld [vmem:[#allocation7 + $0x580] sm:$0xf]
    %v541 = vld [vmem:[#allocation7 + $0x584] sm:$0xf]
    %v542 = vld [vmem:[#allocation7 + $0x588] sm:$0xf]
    %v543 = vld [vmem:[#allocation7 + $0x58c] sm:$0xf]
    %v544 = vld [vmem:[#allocation7 + $0x590] sm:$0xf]
    %v545 = vld [vmem:[#allocation7 + $0x594] sm:$0xf]
    %v546 = vld [vmem:[#allocation7 + $0x598] sm:$0xf]
    %v547 = vld [vmem:[#allocation7 + $0x59c] sm:$0xf]
    %v548 = vld [vmem:[#allocation7 + $0x5a0] sm:$0xf]
    %v549 = vld [vmem:[#allocation7 + $0x5a4] sm:$0xf]
    %v550 = vld [vmem:[#allocation7 + $0x5a8] sm:$0xf]
    %v551 = vld [vmem:[#allocation7 + $0x5ac] sm:$0xf]
    %v552 = vld [vmem:[#allocation7 + $0x5b0] sm:$0xf]
    %v553 = vld [vmem:[#allocation7 + $0x5b4] sm:$0xf]
    %v554 = vld [vmem:[#allocation7 + $0x5b8] sm:$0xf]
    %v555 = vld [vmem:[#allocation7 + $0x5bc] sm:$0xf]
    %v556 = vld [vmem:[#allocation7 + $0x5c0] sm:$0xf]
    %v557 = vld [vmem:[#allocation7 + $0x5c4] sm:$0xf]
    %v558 = vld [vmem:[#allocation7 + $0x5c8] sm:$0xf]
    %v559 = vld [vmem:[#allocation7 + $0x5cc] sm:$0xf]
    %v560 = vld [vmem:[#allocation7 + $0x5d0] sm:$0xf]
    %v561 = vld [vmem:[#allocation7 + $0x5d4] sm:$0xf]
    %v562 = vld [vmem:[#allocation7 + $0x5d8] sm:$0xf]
    %v563 = vld [vmem:[#allocation7 + $0x5dc] sm:$0xf]
    %v564 = vld [vmem:[#allocation7 + $0x5e0] sm:$0xf]
    %v565 = vld [vmem:[#allocation7 + $0x5e4] sm:$0xf]
    %v566 = vld [vmem:[#allocation7 + $0x5e8] sm:$0xf]
    %v567 = vld [vmem:[#allocation7 + $0x5ec] sm:$0xf]
    %v568 = vld [vmem:[#allocation7 + $0x5f0] sm:$0xf]
    %v569 = vld [vmem:[#allocation7 + $0x5f4] sm:$0xf]
    %v570 = vld [vmem:[#allocation7 + $0x5f8] sm:$0xf]
    %v571 = vld [vmem:[#allocation7 + $0x5fc] sm:$0xf]
    %v572 = vld [vmem:[#allocation8] sm:$0xf]
    %v573 = vld [vmem:[#allocation8 + $0x4] sm:$0xf]
    %v574 = vld [vmem:[#allocation8 + $0x8] sm:$0xf]
    %v575 = vld [vmem:[#allocation8 + $0xc] sm:$0xf]
    %v576 = vld [vmem:[#allocation8 + $0x10] sm:$0xf]
    %v577 = vld [vmem:[#allocation8 + $0x14] sm:$0xf]
    %v578 = vld [vmem:[#allocation8 + $0x18] sm:$0xf]
    %v579 = vld [vmem:[#allocation8 + $0x1c] sm:$0xf]
    %v580 = vld [vmem:[#allocation8 + $0x20] sm:$0xf]
    %v581 = vld [vmem:[#allocation8 + $0x24] sm:$0xf]
    %v582 = vld [vmem:[#allocation8 + $0x28] sm:$0xf]
    %v583 = vld [vmem:[#allocation8 + $0x2c] sm:$0xf]
    %v584 = vld [vmem:[#allocation8 + $0x30] sm:$0xf]
    %v585 = vld [vmem:[#allocation8 + $0x34] sm:$0xf]
    %v586 = vld [vmem:[#allocation8 + $0x38] sm:$0xf]
    %v587 = vld [vmem:[#allocation8 + $0x3c] sm:$0xf]
    %v588 = vld [vmem:[#allocation8 + $0x40] sm:$0xf]
    %v589 = vld [vmem:[#allocation8 + $0x44] sm:$0xf]
    %v590 = vld [vmem:[#allocation8 + $0x48] sm:$0xf]
    %v591 = vld [vmem:[#allocation8 + $0x4c] sm:$0xf]
    %v592 = vld [vmem:[#allocation8 + $0x50] sm:$0xf]
    %v593 = vld [vmem:[#allocation8 + $0x54] sm:$0xf]
    %v594 = vld [vmem:[#allocation8 + $0x58] sm:$0xf]
    %v595 = vld [vmem:[#allocation8 + $0x5c] sm:$0xf]
    %v596 = vld [vmem:[#allocation8 + $0x60] sm:$0xf]
    %v597 = vld [vmem:[#allocation8 + $0x64] sm:$0xf]
    %v598 = vld [vmem:[#allocation8 + $0x68] sm:$0xf]
    %v599 = vld [vmem:[#allocation8 + $0x6c] sm:$0xf]
    %v600 = vld [vmem:[#allocation8 + $0x70] sm:$0xf]
    %v601 = vld [vmem:[#allocation8 + $0x74] sm:$0xf]
    %v602 = vld [vmem:[#allocation8 + $0x78] sm:$0xf]
    %v603 = vld [vmem:[#allocation8 + $0x7c] sm:$0xf]
    %v604 = vld [vmem:[#allocation8 + $0x80] sm:$0xf]
    %v605 = vld [vmem:[#allocation8 + $0x84] sm:$0xf]
    %v606 = vld [vmem:[#allocation8 + $0x88] sm:$0xf]
    %v607 = vld [vmem:[#allocation8 + $0x8c] sm:$0xf]
    %v608 = vld [vmem:[#allocation8 + $0x90] sm:$0xf]
    %v609 = vld [vmem:[#allocation8 + $0x94] sm:$0xf]
    %v610 = vld [vmem:[#allocation8 + $0x98] sm:$0xf]
    %v611 = vld [vmem:[#allocation8 + $0x9c] sm:$0xf]
    %v612 = vld [vmem:[#allocation8 + $0xa0] sm:$0xf]
    %v613 = vld [vmem:[#allocation8 + $0xa4] sm:$0xf]
    %v614 = vld [vmem:[#allocation8 + $0xa8] sm:$0xf]
    %v615 = vld [vmem:[#allocation8 + $0xac] sm:$0xf]
    %v616 = vld [vmem:[#allocation8 + $0xb0] sm:$0xf]
    %v617 = vld [vmem:[#allocation8 + $0xb4] sm:$0xf]
    %v618 = vld [vmem:[#allocation8 + $0xb8] sm:$0xf]
    %v619 = vld [vmem:[#allocation8 + $0xbc] sm:$0xf]
    %v620 = vld [vmem:[#allocation8 + $0xc0] sm:$0xf]
    %v621 = vld [vmem:[#allocation8 + $0xc4] sm:$0xf]
    %v622 = vld [vmem:[#allocation8 + $0xc8] sm:$0xf]
    %v623 = vld [vmem:[#allocation8 + $0xcc] sm:$0xf]
    %v624 = vld [vmem:[#allocation8 + $0xd0] sm:$0xf]
    %v625 = vld [vmem:[#allocation8 + $0xd4] sm:$0xf]
    %v626 = vld [vmem:[#allocation8 + $0xd8] sm:$0xf]
    %v627 = vld [vmem:[#allocation8 + $0xdc] sm:$0xf]
    %v628 = vld [vmem:[#allocation8 + $0xe0] sm:$0xf]
    %v629 = vld [vmem:[#allocation8 + $0xe4] sm:$0xf]
    %v630 = vld [vmem:[#allocation8 + $0xe8] sm:$0xf]
    %v631 = vld [vmem:[#allocation8 + $0xec] sm:$0xf]
    %v632 = vld [vmem:[#allocation8 + $0xf0] sm:$0xf]
    %v633 = vld [vmem:[#allocation8 + $0xf4] sm:$0xf]
    %v634 = vld [vmem:[#allocation8 + $0xf8] sm:$0xf]
    %v635 = vld [vmem:[#allocation8 + $0xfc] sm:$0xf]
    %v636 = vld [vmem:[#allocation8 + $0x100] sm:$0xf]
    %v637 = vld [vmem:[#allocation8 + $0x104] sm:$0xf]
    %v638 = vld [vmem:[#allocation8 + $0x108] sm:$0xf]
    %v639 = vld [vmem:[#allocation8 + $0x10c] sm:$0xf]
    %v640 = vld [vmem:[#allocation8 + $0x110] sm:$0xf]
    %v641 = vld [vmem:[#allocation8 + $0x114] sm:$0xf]
    %v642 = vld [vmem:[#allocation8 + $0x118] sm:$0xf]
    %v643 = vld [vmem:[#allocation8 + $0x11c] sm:$0xf]
    %v644 = vld [vmem:[#allocation8 + $0x120] sm:$0xf]
    %v645 = vld [vmem:[#allocation8 + $0x124] sm:$0xf]
    %v646 = vld [vmem:[#allocation8 + $0x128] sm:$0xf]
    %v647 = vld [vmem:[#allocation8 + $0x12c] sm:$0xf]
    %v648 = vld [vmem:[#allocation8 + $0x130] sm:$0xf]
    %v649 = vld [vmem:[#allocation8 + $0x134] sm:$0xf]
    %v650 = vld [vmem:[#allocation8 + $0x138] sm:$0xf]
    %v651 = vld [vmem:[#allocation8 + $0x13c] sm:$0xf]
    %v652 = vld [vmem:[#allocation8 + $0x140] sm:$0xf]
    %v653 = vld [vmem:[#allocation8 + $0x144] sm:$0xf]
    %v654 = vld [vmem:[#allocation8 + $0x148] sm:$0xf]
    %v655 = vld [vmem:[#allocation8 + $0x14c] sm:$0xf]
    %v656 = vld [vmem:[#allocation8 + $0x150] sm:$0xf]
    %v657 = vld [vmem:[#allocation8 + $0x154] sm:$0xf]
    %v658 = vld [vmem:[#allocation8 + $0x158] sm:$0xf]
    %v659 = vld [vmem:[#allocation8 + $0x15c] sm:$0xf]
    %v660 = vld [vmem:[#allocation8 + $0x160] sm:$0xf]
    %v661 = vld [vmem:[#allocation8 + $0x164] sm:$0xf]
    %v662 = vld [vmem:[#allocation8 + $0x168] sm:$0xf]
    %v663 = vld [vmem:[#allocation8 + $0x16c] sm:$0xf]
    %v664 = vld [vmem:[#allocation8 + $0x170] sm:$0xf]
    %v665 = vld [vmem:[#allocation8 + $0x174] sm:$0xf]
    %v666 = vld [vmem:[#allocation8 + $0x178] sm:$0xf]
    %v667 = vld [vmem:[#allocation8 + $0x17c] sm:$0xf]
    %v668 = vld [vmem:[#allocation8 + $0x180] sm:$0xf]
    %v669 = vld [vmem:[#allocation8 + $0x184] sm:$0xf]
    %v670 = vld [vmem:[#allocation8 + $0x188] sm:$0xf]
    %v671 = vld [vmem:[#allocation8 + $0x18c] sm:$0xf]
    %v672 = vld [vmem:[#allocation8 + $0x190] sm:$0xf]
    %v673 = vld [vmem:[#allocation8 + $0x194] sm:$0xf]
    %v674 = vld [vmem:[#allocation8 + $0x198] sm:$0xf]
    %v675 = vld [vmem:[#allocation8 + $0x19c] sm:$0xf]
    %v676 = vld [vmem:[#allocation8 + $0x1a0] sm:$0xf]
    %v677 = vld [vmem:[#allocation8 + $0x1a4] sm:$0xf]
    %v678 = vld [vmem:[#allocation8 + $0x1a8] sm:$0xf]
    %v679 = vld [vmem:[#allocation8 + $0x1ac] sm:$0xf]
    %v680 = vld [vmem:[#allocation8 + $0x1b0] sm:$0xf]
    %v681 = vld [vmem:[#allocation8 + $0x1b4] sm:$0xf]
    %v682 = vld [vmem:[#allocation8 + $0x1b8] sm:$0xf]
    %v683 = vld [vmem:[#allocation8 + $0x1bc] sm:$0xf]
    %v684 = vld [vmem:[#allocation8 + $0x1c0] sm:$0xf]
    %v685 = vld [vmem:[#allocation8 + $0x1c4] sm:$0xf]
    %v686 = vld [vmem:[#allocation8 + $0x1c8] sm:$0xf]
    %v687 = vld [vmem:[#allocation8 + $0x1cc] sm:$0xf]
    %v688 = vld [vmem:[#allocation8 + $0x1d0] sm:$0xf]
    %v689 = vld [vmem:[#allocation8 + $0x1d4] sm:$0xf]
    %v690 = vld [vmem:[#allocation8 + $0x1d8] sm:$0xf]
    %v691 = vld [vmem:[#allocation8 + $0x1dc] sm:$0xf]
    %v692 = vld [vmem:[#allocation8 + $0x1e0] sm:$0xf]
    %v693 = vld [vmem:[#allocation8 + $0x1e4] sm:$0xf]
    %v694 = vld [vmem:[#allocation8 + $0x1e8] sm:$0xf]
    %v695 = vld [vmem:[#allocation8 + $0x1ec] sm:$0xf]
    %v696 = vld [vmem:[#allocation8 + $0x1f0] sm:$0xf]
    %v697 = vld [vmem:[#allocation8 + $0x1f4] sm:$0xf]
    %v698 = vld [vmem:[#allocation8 + $0x1f8] sm:$0xf]
    %v699 = vld [vmem:[#allocation8 + $0x1fc] sm:$0xf]
    %v828 = vunpack.c.l.b16 %v572
    %v829 = vunpack.c.l.b16 %v573
    %v830 = vunpack.c.l.b16 %v574
    %v831 = vunpack.c.l.b16 %v575
    %v832 = vunpack.c.l.b16 %v576
    %v833 = vunpack.c.l.b16 %v577
    %v834 = vunpack.c.l.b16 %v578
    %v835 = vunpack.c.l.b16 %v579
    %v836 = vunpack.c.l.b16 %v580
    %v837 = vunpack.c.l.b16 %v581
    %v838 = vunpack.c.l.b16 %v582
    %v839 = vunpack.c.l.b16 %v583
    %v840 = vunpack.c.l.b16 %v584
    %v841 = vunpack.c.l.b16 %v585
    %v842 = vunpack.c.l.b16 %v586
    %v843 = vunpack.c.l.b16 %v587
    %v844 = vunpack.c.l.b16 %v588
    %v845 = vunpack.c.l.b16 %v589
    %v846 = vunpack.c.l.b16 %v590
    %v847 = vunpack.c.l.b16 %v591
    %v848 = vunpack.c.l.b16 %v592
    %v849 = vunpack.c.l.b16 %v593
    %v850 = vunpack.c.l.b16 %v594
    %v851 = vunpack.c.l.b16 %v595
    %v852 = vunpack.c.l.b16 %v596
    %v853 = vunpack.c.l.b16 %v597
    %v854 = vunpack.c.l.b16 %v598
    %v855 = vunpack.c.l.b16 %v599
    %v856 = vunpack.c.l.b16 %v600
    %v857 = vunpack.c.l.b16 %v601
    %v858 = vunpack.c.l.b16 %v602
    %v859 = vunpack.c.l.b16 %v603
    %v860 = vunpack.c.l.b16 %v604
    %v861 = vunpack.c.l.b16 %v605
    %v862 = vunpack.c.l.b16 %v606
    %v863 = vunpack.c.l.b16 %v607
    %v864 = vunpack.c.l.b16 %v608
    %v865 = vunpack.c.l.b16 %v609
    %v866 = vunpack.c.l.b16 %v610
    %v867 = vunpack.c.l.b16 %v611
    %v868 = vunpack.c.l.b16 %v612
    %v869 = vunpack.c.l.b16 %v613
    %v870 = vunpack.c.l.b16 %v614
    %v871 = vunpack.c.l.b16 %v615
    %v872 = vunpack.c.l.b16 %v616
    %v873 = vunpack.c.l.b16 %v617
    %v874 = vunpack.c.l.b16 %v618
    %v875 = vunpack.c.l.b16 %v619
    %v876 = vunpack.c.l.b16 %v620
    %v877 = vunpack.c.l.b16 %v621
    %v878 = vunpack.c.l.b16 %v622
    %v879 = vunpack.c.l.b16 %v623
    %v880 = vunpack.c.l.b16 %v624
    %v881 = vunpack.c.l.b16 %v625
    %v882 = vunpack.c.l.b16 %v626
    %v883 = vunpack.c.l.b16 %v627
    %v884 = vunpack.c.l.b16 %v628
    %v885 = vunpack.c.l.b16 %v629
    %v886 = vunpack.c.l.b16 %v630
    %v887 = vunpack.c.l.b16 %v631
    %v888 = vunpack.c.l.b16 %v632
    %v889 = vunpack.c.l.b16 %v633
    %v890 = vunpack.c.l.b16 %v634
    %v891 = vunpack.c.l.b16 %v635
    %v892 = vunpack.c.l.b16 %v636
    %v893 = vunpack.c.l.b16 %v637
    %v894 = vunpack.c.l.b16 %v638
    %v895 = vunpack.c.l.b16 %v639
    %v896 = vunpack.c.l.b16 %v640
    %v897 = vunpack.c.l.b16 %v641
    %v898 = vunpack.c.l.b16 %v642
    %v899 = vunpack.c.l.b16 %v643
    %v900 = vunpack.c.l.b16 %v644
    %v901 = vunpack.c.l.b16 %v645
    %v902 = vunpack.c.l.b16 %v646
    %v903 = vunpack.c.l.b16 %v647
    %v904 = vunpack.c.l.b16 %v648
    %v905 = vunpack.c.l.b16 %v649
    %v906 = vunpack.c.l.b16 %v650
    %v907 = vunpack.c.l.b16 %v651
    %v908 = vunpack.c.l.b16 %v652
    %v909 = vunpack.c.l.b16 %v653
    %v910 = vunpack.c.l.b16 %v654
    %v911 = vunpack.c.l.b16 %v655
    %v912 = vunpack.c.l.b16 %v656
    %v913 = vunpack.c.l.b16 %v657
    %v914 = vunpack.c.l.b16 %v658
    %v915 = vunpack.c.l.b16 %v659
    %v916 = vunpack.c.l.b16 %v660
    %v917 = vunpack.c.l.b16 %v661
    %v918 = vunpack.c.l.b16 %v662
    %v919 = vunpack.c.l.b16 %v663
    %v920 = vunpack.c.l.b16 %v664
    %v921 = vunpack.c.l.b16 %v665
    %v922 = vunpack.c.l.b16 %v666
    %v923 = vunpack.c.l.b16 %v667
    %v924 = vunpack.c.l.b16 %v668
    %v925 = vunpack.c.l.b16 %v669
    %v926 = vunpack.c.l.b16 %v670
    %v927 = vunpack.c.l.b16 %v671
    %v928 = vunpack.c.l.b16 %v672
    %v929 = vunpack.c.l.b16 %v673
    %v930 = vunpack.c.l.b16 %v674
    %v931 = vunpack.c.l.b16 %v675
    %v932 = vunpack.c.l.b16 %v676
    %v933 = vunpack.c.l.b16 %v677
    %v934 = vunpack.c.l.b16 %v678
    %v935 = vunpack.c.l.b16 %v679
    %v936 = vunpack.c.l.b16 %v680
    %v937 = vunpack.c.l.b16 %v681
    %v938 = vunpack.c.l.b16 %v682
    %v939 = vunpack.c.l.b16 %v683
    %v940 = vunpack.c.l.b16 %v684
    %v941 = vunpack.c.l.b16 %v685
    %v942 = vunpack.c.l.b16 %v686
    %v943 = vunpack.c.l.b16 %v687
    %v944 = vunpack.c.l.b16 %v688
    %v945 = vunpack.c.l.b16 %v689
    %v946 = vunpack.c.l.b16 %v690
    %v947 = vunpack.c.l.b16 %v691
    %v948 = vunpack.c.l.b16 %v692
    %v949 = vunpack.c.l.b16 %v693
    %v950 = vunpack.c.l.b16 %v694
    %v951 = vunpack.c.l.b16 %v695
    %v952 = vunpack.c.l.b16 %v696
    %v953 = vunpack.c.l.b16 %v697
    %v954 = vunpack.c.l.b16 %v698
    %v955 = vunpack.c.l.b16 %v699
    %v956 = vpack.c.b16 %v829, %v828
    %v957 = vpack.c.b16 %v831, %v830
    %v958 = vpack.c.b16 %v833, %v832
    %v959 = vpack.c.b16 %v835, %v834
    %v960 = vpack.c.b16 %v837, %v836
    %v961 = vpack.c.b16 %v839, %v838
    %v962 = vpack.c.b16 %v841, %v840
    %v963 = vpack.c.b16 %v843, %v842
    %v964 = vpack.c.b16 %v845, %v844
    %v965 = vpack.c.b16 %v847, %v846
    %v966 = vpack.c.b16 %v849, %v848
    %v967 = vpack.c.b16 %v851, %v850
    %v968 = vpack.c.b16 %v853, %v852
    %v969 = vpack.c.b16 %v855, %v854
    %v970 = vpack.c.b16 %v857, %v856
    %v971 = vpack.c.b16 %v859, %v858
    %v972 = vpack.c.b16 %v861, %v860
    %v973 = vpack.c.b16 %v863, %v862
    %v974 = vpack.c.b16 %v865, %v864
    %v975 = vpack.c.b16 %v867, %v866
    %v976 = vpack.c.b16 %v869, %v868
    %v977 = vpack.c.b16 %v871, %v870
    %v978 = vpack.c.b16 %v873, %v872
    %v979 = vpack.c.b16 %v875, %v874
    %v980 = vpack.c.b16 %v877, %v876
    %v981 = vpack.c.b16 %v879, %v878
    %v982 = vpack.c.b16 %v881, %v880
    %v983 = vpack.c.b16 %v883, %v882
    %v984 = vpack.c.b16 %v885, %v884
    %v985 = vpack.c.b16 %v887, %v886
    %v986 = vpack.c.b16 %v889, %v888
    %v987 = vpack.c.b16 %v891, %v890
    %v988 = vpack.c.b16 %v893, %v892
    %v989 = vpack.c.b16 %v895, %v894
    %v990 = vpack.c.b16 %v897, %v896
    %v991 = vpack.c.b16 %v899, %v898
    %v992 = vpack.c.b16 %v901, %v900
    %v993 = vpack.c.b16 %v903, %v902
    %v994 = vpack.c.b16 %v905, %v904
    %v995 = vpack.c.b16 %v907, %v906
    %v996 = vpack.c.b16 %v909, %v908
    %v997 = vpack.c.b16 %v911, %v910
    %v998 = vpack.c.b16 %v913, %v912
    %v999 = vpack.c.b16 %v915, %v914
    %v1000 = vpack.c.b16 %v917, %v916
    %v1001 = vpack.c.b16 %v919, %v918
    %v1002 = vpack.c.b16 %v921, %v920
    %v1003 = vpack.c.b16 %v923, %v922
    %v1004 = vpack.c.b16 %v925, %v924
    %v1005 = vpack.c.b16 %v927, %v926
    %v1006 = vpack.c.b16 %v929, %v928
    %v1007 = vpack.c.b16 %v931, %v930
    %v1008 = vpack.c.b16 %v933, %v932
    %v1009 = vpack.c.b16 %v935, %v934
    %v1010 = vpack.c.b16 %v937, %v936
    %v1011 = vpack.c.b16 %v939, %v938
    %v1012 = vpack.c.b16 %v941, %v940
    %v1013 = vpack.c.b16 %v943, %v942
    %v1014 = vpack.c.b16 %v945, %v944
    %v1015 = vpack.c.b16 %v947, %v946
    %v1016 = vpack.c.b16 %v949, %v948
    %v1017 = vpack.c.b16 %v951, %v950
    %v1018 = vpack.c.b16 %v953, %v952
    %v1019 = vpack.c.b16 %v955, %v954
    %1084 = vmatprep.subr.bf16.mxu0 0
    %1085 = vmatpush1.bf16.msra.mxu0 %v956
    %1086 = vmatprep.subr.bf16.mxu0 0
    %1087 = vmatpush1.bf16.msra.mxu0 %v957
    %1088 = vmatprep.subr.bf16.mxu0 0
    %1089 = vmatpush1.bf16.msra.mxu0 %v958
    %1090 = vmatprep.subr.bf16.mxu0 0
    %1091 = vmatpush1.bf16.msra.mxu0 %v959
    %1092 = vmatprep.subr.bf16.mxu0 0
    %1093 = vmatpush1.bf16.msra.mxu0 %v960
    %1094 = vmatprep.subr.bf16.mxu0 0
    %1095 = vmatpush1.bf16.msra.mxu0 %v961
    %1096 = vmatprep.subr.bf16.mxu0 0
    %1097 = vmatpush1.bf16.msra.mxu0 %v962
    %1098 = vmatprep.subr.bf16.mxu0 0
    %1099 = vmatpush1.bf16.msra.mxu0 %v963
    %1100 = vmatprep.subr.bf16.mxu0 0
    %1101 = vmatpush1.bf16.msra.mxu0 %v964
    %1102 = vmatprep.subr.bf16.mxu0 0
    %1103 = vmatpush1.bf16.msra.mxu0 %v965
    %1104 = vmatprep.subr.bf16.mxu0 0
    %1105 = vmatpush1.bf16.msra.mxu0 %v966
    %1106 = vmatprep.subr.bf16.mxu0 0
    %1107 = vmatpush1.bf16.msra.mxu0 %v967
    %1108 = vmatprep.subr.bf16.mxu0 0
    %1109 = vmatpush1.bf16.msra.mxu0 %v968
    %1110 = vmatprep.subr.bf16.mxu0 0
    %1111 = vmatpush1.bf16.msra.mxu0 %v969
    %1112 = vmatprep.subr.bf16.mxu0 0
    %1113 = vmatpush1.bf16.msra.mxu0 %v970
    %1114 = vmatprep.subr.bf16.mxu0 0
    %1115 = vmatpush1.bf16.msra.mxu0 %v971
    %1116 = vmatprep.mubr.bf16.mxu0 %v181
    %1117 = vmatmul.mubr.bf16.gmra.mrb[0].mxu0 %v180
    %v1118 = vpop.f32.mrb[0].mxu0
    %v1119 = vadd.f32 0.0, %v1118
    %v1120 = vpop.f32.mrb[0].mxu0
    %v1121 = vpop.f32.mrb[0].mxu0
    %v1122 = vpop.f32.mrb[0].mxu0
    %1123 = vdwg.mxu0
    %1124 = vmatprep.subr.bf16.mxu0 0
    %1125 = vmatpush1.bf16.msra.mxu0 %v972
    %1126 = vmatprep.subr.bf16.mxu0 0
    %1127 = vmatpush1.bf16.msra.mxu0 %v973
    %1128 = vmatprep.subr.bf16.mxu0 0
    %1129 = vmatpush1.bf16.msra.mxu0 %v974
    %1130 = vmatprep.subr.bf16.mxu0 0
    %1131 = vmatpush1.bf16.msra.mxu0 %v975
    %1132 = vmatprep.subr.bf16.mxu0 0
    %1133 = vmatpush1.bf16.msra.mxu0 %v976
    %1134 = vmatprep.subr.bf16.mxu0 0
    %1135 = vmatpush1.bf16.msra.mxu0 %v977
    %1136 = vmatprep.subr.bf16.mxu0 0
    %1137 = vmatpush1.bf16.msra.mxu0 %v978
    %1138 = vmatprep.subr.bf16.mxu0 0
    %1139 = vmatpush1.bf16.msra.mxu0 %v979
    %1140 = vmatprep.subr.bf16.mxu0 0
    %1141 = vmatpush1.bf16.msra.mxu0 %v980
    %1142 = vmatprep.subr.bf16.mxu0 0
    %1143 = vmatpush1.bf16.msra.mxu0 %v981
    %1144 = vmatprep.subr.bf16.mxu0 0
    %1145 = vmatpush1.bf16.msra.mxu0 %v982
    %1146 = vmatprep.subr.bf16.mxu0 0
    %1147 = vmatpush1.bf16.msra.mxu0 %v983
    %1148 = vmatprep.subr.bf16.mxu0 0
    %1149 = vmatpush1.bf16.msra.mxu0 %v984
    %1150 = vmatprep.subr.bf16.mxu0 0
    %1151 = vmatpush1.bf16.msra.mxu0 %v985
    %1152 = vmatprep.subr.bf16.mxu0 0
    %1153 = vmatpush1.bf16.msra.mxu0 %v986
    %1154 = vmatprep.subr.bf16.mxu0 0
    %1155 = vmatpush1.bf16.msra.mxu0 %v987
    %1156 = vmatprep.mubr.bf16.mxu0 %v183
    %1157 = vmatmul.mubr.bf16.gmra.mrb[0].mxu0 %v182
    %v1158 = vpop.f32.mrb[0].mxu0
    %v1159 = vadd.f32 %v1119, %v1158
    %v1160 = vpop.f32.mrb[0].mxu0
    %v1161 = vpop.f32.mrb[0].mxu0
    %v1162 = vpop.f32.mrb[0].mxu0
    %1163 = vdwg.mxu0
    %1164 = vmatprep.subr.bf16.mxu0 0
    %1165 = vmatpush1.bf16.msra.mxu0 %v988
    %1166 = vmatprep.subr.bf16.mxu0 0
    %1167 = vmatpush1.bf16.msra.mxu0 %v989
    %1168 = vmatprep.subr.bf16.mxu0 0
    %1169 = vmatpush1.bf16.msra.mxu0 %v990
    %1170 = vmatprep.subr.bf16.mxu0 0
    %1171 = vmatpush1.bf16.msra.mxu0 %v991
    %1172 = vmatprep.subr.bf16.mxu0 0
    %1173 = vmatpush1.bf16.msra.mxu0 %v992
    %1174 = vmatprep.subr.bf16.mxu0 0
    %1175 = vmatpush1.bf16.msra.mxu0 %v993
    %1176 = vmatprep.subr.bf16.mxu0 0
    %1177 = vmatpush1.bf16.msra.mxu0 %v994
    %1178 = vmatprep.subr.bf16.mxu0 0
    %1179 = vmatpush1.bf16.msra.mxu0 %v995
    %1180 = vmatprep.subr.bf16.mxu0 0
    %1181 = vmatpush1.bf16.msra.mxu0 %v996
    %1182 = vmatprep.subr.bf16.mxu0 0
    %1183 = vmatpush1.bf16.msra.mxu0 %v997
    %1184 = vmatprep.subr.bf16.mxu0 0
    %1185 = vmatpush1.bf16.msra.mxu0 %v998
    %1186 = vmatprep.subr.bf16.mxu0 0
    %1187 = vmatpush1.bf16.msra.mxu0 %v999
    %1188 = vmatprep.subr.bf16.mxu0 0
    %1189 = vmatpush1.bf16.msra.mxu0 %v1000
    %1190 = vmatprep.subr.bf16.mxu0 0
    %1191 = vmatpush1.bf16.msra.mxu0 %v1001
    %1192 = vmatprep.subr.bf16.mxu0 0
    %1193 = vmatpush1.bf16.msra.mxu0 %v1002
    %1194 = vmatprep.subr.bf16.mxu0 0
    %1195 = vmatpush1.bf16.msra.mxu0 %v1003
    %1196 = vmatprep.mubr.bf16.mxu0 %v185
    %1197 = vmatmul.mubr.bf16.gmra.mrb[0].mxu0 %v184
    %v1198 = vpop.f32.mrb[0].mxu0
    %v1199 = vadd.f32 %v1159, %v1198
    %v1200 = vpop.f32.mrb[0].mxu0
    %v1201 = vpop.f32.mrb[0].mxu0
    %v1202 = vpop.f32.mrb[0].mxu0
    %1203 = vdwg.mxu0
    %1204 = vmatprep.subr.bf16.mxu0 0
    %1205 = vmatpush1.bf16.msra.mxu0 %v1004
    %1206 = vmatprep.subr.bf16.mxu0 0
    %1207 = vmatpush1.bf16.msra.mxu0 %v1005
    %1208 = vmatprep.subr.bf16.mxu0 0
    %1209 = vmatpush1.bf16.msra.mxu0 %v1006
    %1210 = vmatprep.subr.bf16.mxu0 0
    %1211 = vmatpush1.bf16.msra.mxu0 %v1007
    %1212 = vmatprep.subr.bf16.mxu0 0
    %1213 = vmatpush1.bf16.msra.mxu0 %v1008
    %1214 = vmatprep.subr.bf16.mxu0 0
    %1215 = vmatpush1.bf16.msra.mxu0 %v1009
    %1216 = vmatprep.subr.bf16.mxu0 0
    %1217 = vmatpush1.bf16.msra.mxu0 %v1010
    %1218 = vmatprep.subr.bf16.mxu0 0
    %1219 = vmatpush1.bf16.msra.mxu0 %v1011
    %1220 = vmatprep.subr.bf16.mxu0 0
    %1221 = vmatpush1.bf16.msra.mxu0 %v1012
    %1222 = vmatprep.subr.bf16.mxu0 0
    %1223 = vmatpush1.bf16.msra.mxu0 %v1013
    %1224 = vmatprep.subr.bf16.mxu0 0
    %1225 = vmatpush1.bf16.msra.mxu0 %v1014
    %1226 = vmatprep.subr.bf16.mxu0 0
    %1227 = vmatpush1.bf16.msra.mxu0 %v1015
    %1228 = vmatprep.subr.bf16.mxu0 0
    %1229 = vmatpush1.bf16.msra.mxu0 %v1016
    %1230 = vmatprep.subr.bf16.mxu0 0
    %1231 = vmatpush1.bf16.msra.mxu0 %v1017
    %1232 = vmatprep.subr.bf16.mxu0 0
    %1233 = vmatpush1.bf16.msra.mxu0 %v1018
    %1234 = vmatprep.subr.bf16.mxu0 0
    %1235 = vmatpush1.bf16.msra.mxu0 %v1019
    %1236 = vmatprep.mubr.bf16.mxu0 %v187
    %1237 = vmatmul.mubr.bf16.gmra.mrb[0].mxu0 %v186
    %v1238 = vpop.f32.mrb[0].mxu0
    %v1239 = vadd.f32 %v1199, %v1238
    %v1240 = vpop.f32.mrb[0].mxu0
    %v1241 = vpop.f32.mrb[0].mxu0
    %v1242 = vpop.f32.mrb[0].mxu0
    %1243 = vdwg.mxu0
    %v1628 = vunpack.c.l.b16 %v188
    %v1629 = vunpack.c.l.b16 %v189
    %v1630 = vunpack.c.l.b16 %v190
    %v1631 = vunpack.c.l.b16 %v191
    %v1632 = vunpack.c.l.b16 %v192
    %v1633 = vunpack.c.l.b16 %v193
    %v1634 = vunpack.c.l.b16 %v194
    %v1635 = vunpack.c.l.b16 %v195
    %v1636 = vunpack.c.l.b16 %v196
    %v1637 = vunpack.c.l.b16 %v197
    %v1638 = vunpack.c.l.b16 %v198
    %v1639 = vunpack.c.l.b16 %v199
    %v1640 = vunpack.c.l.b16 %v200
    %v1641 = vunpack.c.l.b16 %v201
    %v1642 = vunpack.c.l.b16 %v202
    %v1643 = vunpack.c.l.b16 %v203
    %v1644 = vunpack.c.l.b16 %v204
    %v1645 = vunpack.c.l.b16 %v205
    %v1646 = vunpack.c.l.b16 %v206
    %v1647 = vunpack.c.l.b16 %v207
    %v1648 = vunpack.c.l.b16 %v208
    %v1649 = vunpack.c.l.b16 %v209
    %v1650 = vunpack.c.l.b16 %v210
    %v1651 = vunpack.c.l.b16 %v211
    %v1652 = vunpack.c.l.b16 %v212
    %v1653 = vunpack.c.l.b16 %v213
    %v1654 = vunpack.c.l.b16 %v214
    %v1655 = vunpack.c.l.b16 %v215
    %v1656 = vunpack.c.l.b16 %v216
    %v1657 = vunpack.c.l.b16 %v217
    %v1658 = vunpack.c.l.b16 %v218
    %v1659 = vunpack.c.l.b16 %v219
    %v1660 = vunpack.c.l.b16 %v220
    %v1661 = vunpack.c.l.b16 %v221
    %v1662 = vunpack.c.l.b16 %v222
    %v1663 = vunpack.c.l.b16 %v223
    %v1664 = vunpack.c.l.b16 %v224
    %v1665 = vunpack.c.l.b16 %v225
    %v1666 = vunpack.c.l.b16 %v226
    %v1667 = vunpack.c.l.b16 %v227
    %v1668 = vunpack.c.l.b16 %v228
    %v1669 = vunpack.c.l.b16 %v229
    %v1670 = vunpack.c.l.b16 %v230
    %v1671 = vunpack.c.l.b16 %v231
    %v1672 = vunpack.c.l.b16 %v232
    %v1673 = vunpack.c.l.b16 %v233
    %v1674 = vunpack.c.l.b16 %v234
    %v1675 = vunpack.c.l.b16 %v235
    %v1676 = vunpack.c.l.b16 %v236
    %v1677 = vunpack.c.l.b16 %v237
    %v1678 = vunpack.c.l.b16 %v238
    %v1679 = vunpack.c.l.b16 %v239
    %v1680 = vunpack.c.l.b16 %v240
    %v1681 = vunpack.c.l.b16 %v241
    %v1682 = vunpack.c.l.b16 %v242
    %v1683 = vunpack.c.l.b16 %v243
    %v1684 = vunpack.c.l.b16 %v244
    %v1685 = vunpack.c.l.b16 %v245
    %v1686 = vunpack.c.l.b16 %v246
    %v1687 = vunpack.c.l.b16 %v247
    %v1688 = vunpack.c.l.b16 %v248
    %v1689 = vunpack.c.l.b16 %v249
    %v1690 = vunpack.c.l.b16 %v250
    %v1691 = vunpack.c.l.b16 %v251
    %v1692 = vunpack.c.l.b16 %v252
    %v1693 = vunpack.c.l.b16 %v253
    %v1694 = vunpack.c.l.b16 %v254
    %v1695 = vunpack.c.l.b16 %v255
    %v1696 = vunpack.c.l.b16 %v256
    %v1697 = vunpack.c.l.b16 %v257
    %v1698 = vunpack.c.l.b16 %v258
    %v1699 = vunpack.c.l.b16 %v259
    %v1700 = vunpack.c.l.b16 %v260
    %v1701 = vunpack.c.l.b16 %v261
    %v1702 = vunpack.c.l.b16 %v262
    %v1703 = vunpack.c.l.b16 %v263
    %v1704 = vunpack.c.l.b16 %v264
    %v1705 = vunpack.c.l.b16 %v265
    %v1706 = vunpack.c.l.b16 %v266
    %v1707 = vunpack.c.l.b16 %v267
    %v1708 = vunpack.c.l.b16 %v268
    %v1709 = vunpack.c.l.b16 %v269
    %v1710 = vunpack.c.l.b16 %v270
    %v1711 = vunpack.c.l.b16 %v271
    %v1712 = vunpack.c.l.b16 %v272
    %v1713 = vunpack.c.l.b16 %v273
    %v1714 = vunpack.c.l.b16 %v274
    %v1715 = vunpack.c.l.b16 %v275
    %v1716 = vunpack.c.l.b16 %v276
    %v1717 = vunpack.c.l.b16 %v277
    %v1718 = vunpack.c.l.b16 %v278
    %v1719 = vunpack.c.l.b16 %v279
    %v1720 = vunpack.c.l.b16 %v280
    %v1721 = vunpack.c.l.b16 %v281
    %v1722 = vunpack.c.l.b16 %v282
    %v1723 = vunpack.c.l.b16 %v283
    %v1724 = vunpack.c.l.b16 %v284
    %v1725 = vunpack.c.l.b16 %v285
    %v1726 = vunpack.c.l.b16 %v286
    %v1727 = vunpack.c.l.b16 %v287
    %v1728 = vunpack.c.l.b16 %v288
    %v1729 = vunpack.c.l.b16 %v289
    %v1730 = vunpack.c.l.b16 %v290
    %v1731 = vunpack.c.l.b16 %v291
    %v1732 = vunpack.c.l.b16 %v292
    %v1733 = vunpack.c.l.b16 %v293
    %v1734 = vunpack.c.l.b16 %v294
    %v1735 = vunpack.c.l.b16 %v295
    %v1736 = vunpack.c.l.b16 %v296
    %v1737 = vunpack.c.l.b16 %v297
    %v1738 = vunpack.c.l.b16 %v298
    %v1739 = vunpack.c.l.b16 %v299
    %v1740 = vunpack.c.l.b16 %v300
    %v1741 = vunpack.c.l.b16 %v301
    %v1742 = vunpack.c.l.b16 %v302
    %v1743 = vunpack.c.l.b16 %v303
    %v1744 = vunpack.c.l.b16 %v304
    %v1745 = vunpack.c.l.b16 %v305
    %v1746 = vunpack.c.l.b16 %v306
    %v1747 = vunpack.c.l.b16 %v307
    %v1748 = vunpack.c.l.b16 %v308
    %v1749 = vunpack.c.l.b16 %v309
    %v1750 = vunpack.c.l.b16 %v310
    %v1751 = vunpack.c.l.b16 %v311
    %v1752 = vunpack.c.l.b16 %v312
    %v1753 = vunpack.c.l.b16 %v313
    %v1754 = vunpack.c.l.b16 %v314
    %v1755 = vunpack.c.l.b16 %v315
    %v1756 = vunpack.c.l.b16 %v316
    %v1757 = vunpack.c.l.b16 %v317
    %v1758 = vunpack.c.l.b16 %v318
    %v1759 = vunpack.c.l.b16 %v319
    %v1760 = vunpack.c.l.b16 %v320
    %v1761 = vunpack.c.l.b16 %v321
    %v1762 = vunpack.c.l.b16 %v322
    %v1763 = vunpack.c.l.b16 %v323
    %v1764 = vunpack.c.l.b16 %v324
    %v1765 = vunpack.c.l.b16 %v325
    %v1766 = vunpack.c.l.b16 %v326
    %v1767 = vunpack.c.l.b16 %v327
    %v1768 = vunpack.c.l.b16 %v328
    %v1769 = vunpack.c.l.b16 %v329
    %v1770 = vunpack.c.l.b16 %v330
    %v1771 = vunpack.c.l.b16 %v331
    %v1772 = vunpack.c.l.b16 %v332
    %v1773 = vunpack.c.l.b16 %v333
    %v1774 = vunpack.c.l.b16 %v334
    %v1775 = vunpack.c.l.b16 %v335
    %v1776 = vunpack.c.l.b16 %v336
    %v1777 = vunpack.c.l.b16 %v337
    %v1778 = vunpack.c.l.b16 %v338
    %v1779 = vunpack.c.l.b16 %v339
    %v1780 = vunpack.c.l.b16 %v340
    %v1781 = vunpack.c.l.b16 %v341
    %v1782 = vunpack.c.l.b16 %v342
    %v1783 = vunpack.c.l.b16 %v343
    %v1784 = vunpack.c.l.b16 %v344
    %v1785 = vunpack.c.l.b16 %v345
    %v1786 = vunpack.c.l.b16 %v346
    %v1787 = vunpack.c.l.b16 %v347
    %v1788 = vunpack.c.l.b16 %v348
    %v1789 = vunpack.c.l.b16 %v349
    %v1790 = vunpack.c.l.b16 %v350
    %v1791 = vunpack.c.l.b16 %v351
    %v1792 = vunpack.c.l.b16 %v352
    %v1793 = vunpack.c.l.b16 %v353
    %v1794 = vunpack.c.l.b16 %v354
    %v1795 = vunpack.c.l.b16 %v355
    %v1796 = vunpack.c.l.b16 %v356
    %v1797 = vunpack.c.l.b16 %v357
    %v1798 = vunpack.c.l.b16 %v358
    %v1799 = vunpack.c.l.b16 %v359
    %v1800 = vunpack.c.l.b16 %v360
    %v1801 = vunpack.c.l.b16 %v361
    %v1802 = vunpack.c.l.b16 %v362
    %v1803 = vunpack.c.l.b16 %v363
    %v1804 = vunpack.c.l.b16 %v364
    %v1805 = vunpack.c.l.b16 %v365
    %v1806 = vunpack.c.l.b16 %v366
    %v1807 = vunpack.c.l.b16 %v367
    %v1808 = vunpack.c.l.b16 %v368
    %v1809 = vunpack.c.l.b16 %v369
    %v1810 = vunpack.c.l.b16 %v370
    %v1811 = vunpack.c.l.b16 %v371
    %v1812 = vunpack.c.l.b16 %v372
    %v1813 = vunpack.c.l.b16 %v373
    %v1814 = vunpack.c.l.b16 %v374
    %v1815 = vunpack.c.l.b16 %v375
    %v1816 = vunpack.c.l.b16 %v376
    %v1817 = vunpack.c.l.b16 %v377
    %v1818 = vunpack.c.l.b16 %v378
    %v1819 = vunpack.c.l.b16 %v379
    %v1820 = vunpack.c.l.b16 %v380
    %v1821 = vunpack.c.l.b16 %v381
    %v1822 = vunpack.c.l.b16 %v382
    %v1823 = vunpack.c.l.b16 %v383
    %v1824 = vunpack.c.l.b16 %v384
    %v1825 = vunpack.c.l.b16 %v385
    %v1826 = vunpack.c.l.b16 %v386
    %v1827 = vunpack.c.l.b16 %v387
    %v1828 = vunpack.c.l.b16 %v388
    %v1829 = vunpack.c.l.b16 %v389
    %v1830 = vunpack.c.l.b16 %v390
    %v1831 = vunpack.c.l.b16 %v391
    %v1832 = vunpack.c.l.b16 %v392
    %v1833 = vunpack.c.l.b16 %v393
    %v1834 = vunpack.c.l.b16 %v394
    %v1835 = vunpack.c.l.b16 %v395
    %v1836 = vunpack.c.l.b16 %v396
    %v1837 = vunpack.c.l.b16 %v397
    %v1838 = vunpack.c.l.b16 %v398
    %v1839 = vunpack.c.l.b16 %v399
    %v1840 = vunpack.c.l.b16 %v400
    %v1841 = vunpack.c.l.b16 %v401
    %v1842 = vunpack.c.l.b16 %v402
    %v1843 = vunpack.c.l.b16 %v403
    %v1844 = vunpack.c.l.b16 %v404
    %v1845 = vunpack.c.l.b16 %v405
    %v1846 = vunpack.c.l.b16 %v406
    %v1847 = vunpack.c.l.b16 %v407
    %v1848 = vunpack.c.l.b16 %v408
    %v1849 = vunpack.c.l.b16 %v409
    %v1850 = vunpack.c.l.b16 %v410
    %v1851 = vunpack.c.l.b16 %v411
    %v1852 = vunpack.c.l.b16 %v412
    %v1853 = vunpack.c.l.b16 %v413
    %v1854 = vunpack.c.l.b16 %v414
    %v1855 = vunpack.c.l.b16 %v415
    %v1856 = vunpack.c.l.b16 %v416
    %v1857 = vunpack.c.l.b16 %v417
    %v1858 = vunpack.c.l.b16 %v418
    %v1859 = vunpack.c.l.b16 %v419
    %v1860 = vunpack.c.l.b16 %v420
    %v1861 = vunpack.c.l.b16 %v421
    %v1862 = vunpack.c.l.b16 %v422
    %v1863 = vunpack.c.l.b16 %v423
    %v1864 = vunpack.c.l.b16 %v424
    %v1865 = vunpack.c.l.b16 %v425
    %v1866 = vunpack.c.l.b16 %v426
    %v1867 = vunpack.c.l.b16 %v427
    %v1868 = vunpack.c.l.b16 %v428
    %v1869 = vunpack.c.l.b16 %v429
    %v1870 = vunpack.c.l.b16 %v430
    %v1871 = vunpack.c.l.b16 %v431
    %v1872 = vunpack.c.l.b16 %v432
    %v1873 = vunpack.c.l.b16 %v433
    %v1874 = vunpack.c.l.b16 %v434
    %v1875 = vunpack.c.l.b16 %v435
    %v1876 = vunpack.c.l.b16 %v436
    %v1877 = vunpack.c.l.b16 %v437
    %v1878 = vunpack.c.l.b16 %v438
    %v1879 = vunpack.c.l.b16 %v439
    %v1880 = vunpack.c.l.b16 %v440
    %v1881 = vunpack.c.l.b16 %v441
    %v1882 = vunpack.c.l.b16 %v442
    %v1883 = vunpack.c.l.b16 %v443
    %v1884 = vunpack.c.l.b16 %v444
    %v1885 = vunpack.c.l.b16 %v445
    %v1886 = vunpack.c.l.b16 %v446
    %v1887 = vunpack.c.l.b16 %v447
    %v1888 = vunpack.c.l.b16 %v448
    %v1889 = vunpack.c.l.b16 %v449
    %v1890 = vunpack.c.l.b16 %v450
    %v1891 = vunpack.c.l.b16 %v451
    %v1892 = vunpack.c.l.b16 %v452
    %v1893 = vunpack.c.l.b16 %v453
    %v1894 = vunpack.c.l.b16 %v454
    %v1895 = vunpack.c.l.b16 %v455
    %v1896 = vunpack.c.l.b16 %v456
    %v1897 = vunpack.c.l.b16 %v457
    %v1898 = vunpack.c.l.b16 %v458
    %v1899 = vunpack.c.l.b16 %v459
    %v1900 = vunpack.c.l.b16 %v460
    %v1901 = vunpack.c.l.b16 %v461
    %v1902 = vunpack.c.l.b16 %v462
    %v1903 = vunpack.c.l.b16 %v463
    %v1904 = vunpack.c.l.b16 %v464
    %v1905 = vunpack.c.l.b16 %v465
    %v1906 = vunpack.c.l.b16 %v466
    %v1907 = vunpack.c.l.b16 %v467
    %v1908 = vunpack.c.l.b16 %v468
    %v1909 = vunpack.c.l.b16 %v469
    %v1910 = vunpack.c.l.b16 %v470
    %v1911 = vunpack.c.l.b16 %v471
    %v1912 = vunpack.c.l.b16 %v472
    %v1913 = vunpack.c.l.b16 %v473
    %v1914 = vunpack.c.l.b16 %v474
    %v1915 = vunpack.c.l.b16 %v475
    %v1916 = vunpack.c.l.b16 %v476
    %v1917 = vunpack.c.l.b16 %v477
    %v1918 = vunpack.c.l.b16 %v478
    %v1919 = vunpack.c.l.b16 %v479
    %v1920 = vunpack.c.l.b16 %v480
    %v1921 = vunpack.c.l.b16 %v481
    %v1922 = vunpack.c.l.b16 %v482
    %v1923 = vunpack.c.l.b16 %v483
    %v1924 = vunpack.c.l.b16 %v484
    %v1925 = vunpack.c.l.b16 %v485
    %v1926 = vunpack.c.l.b16 %v486
    %v1927 = vunpack.c.l.b16 %v487
    %v1928 = vunpack.c.l.b16 %v488
    %v1929 = vunpack.c.l.b16 %v489
    %v1930 = vunpack.c.l.b16 %v490
    %v1931 = vunpack.c.l.b16 %v491
    %v1932 = vunpack.c.l.b16 %v492
    %v1933 = vunpack.c.l.b16 %v493
    %v1934 = vunpack.c.l.b16 %v494
    %v1935 = vunpack.c.l.b16 %v495
    %v1936 = vunpack.c.l.b16 %v496
    %v1937 = vunpack.c.l.b16 %v497
    %v1938 = vunpack.c.l.b16 %v498
    %v1939 = vunpack.c.l.b16 %v499
    %v1940 = vunpack.c.l.b16 %v500
    %v1941 = vunpack.c.l.b16 %v501
    %v1942 = vunpack.c.l.b16 %v502
    %v1943 = vunpack.c.l.b16 %v503
    %v1944 = vunpack.c.l.b16 %v504
    %v1945 = vunpack.c.l.b16 %v505
    %v1946 = vunpack.c.l.b16 %v506
    %v1947 = vunpack.c.l.b16 %v507
    %v1948 = vunpack.c.l.b16 %v508
    %v1949 = vunpack.c.l.b16 %v509
    %v1950 = vunpack.c.l.b16 %v510
    %v1951 = vunpack.c.l.b16 %v511
    %v1952 = vunpack.c.l.b16 %v512
    %v1953 = vunpack.c.l.b16 %v513
    %v1954 = vunpack.c.l.b16 %v514
    %v1955 = vunpack.c.l.b16 %v515
    %v1956 = vunpack.c.l.b16 %v516
    %v1957 = vunpack.c.l.b16 %v517
    %v1958 = vunpack.c.l.b16 %v518
    %v1959 = vunpack.c.l.b16 %v519
    %v1960 = vunpack.c.l.b16 %v520
    %v1961 = vunpack.c.l.b16 %v521
    %v1962 = vunpack.c.l.b16 %v522
    %v1963 = vunpack.c.l.b16 %v523
    %v1964 = vunpack.c.l.b16 %v524
    %v1965 = vunpack.c.l.b16 %v525
    %v1966 = vunpack.c.l.b16 %v526
    %v1967 = vunpack.c.l.b16 %v527
    %v1968 = vunpack.c.l.b16 %v528
    %v1969 = vunpack.c.l.b16 %v529
    %v1970 = vunpack.c.l.b16 %v530
    %v1971 = vunpack.c.l.b16 %v531
    %v1972 = vunpack.c.l.b16 %v532
    %v1973 = vunpack.c.l.b16 %v533
    %v1974 = vunpack.c.l.b16 %v534
    %v1975 = vunpack.c.l.b16 %v535
    %v1976 = vunpack.c.l.b16 %v536
    %v1977 = vunpack.c.l.b16 %v537
    %v1978 = vunpack.c.l.b16 %v538
    %v1979 = vunpack.c.l.b16 %v539
    %v1980 = vunpack.c.l.b16 %v540
    %v1981 = vunpack.c.l.b16 %v541
    %v1982 = vunpack.c.l.b16 %v542
    %v1983 = vunpack.c.l.b16 %v543
    %v1984 = vunpack.c.l.b16 %v544
    %v1985 = vunpack.c.l.b16 %v545
    %v1986 = vunpack.c.l.b16 %v546
    %v1987 = vunpack.c.l.b16 %v547
    %v1988 = vunpack.c.l.b16 %v548
    %v1989 = vunpack.c.l.b16 %v549
    %v1990 = vunpack.c.l.b16 %v550
    %v1991 = vunpack.c.l.b16 %v551
    %v1992 = vunpack.c.l.b16 %v552
    %v1993 = vunpack.c.l.b16 %v553
    %v1994 = vunpack.c.l.b16 %v554
    %v1995 = vunpack.c.l.b16 %v555
    %v1996 = vunpack.c.l.b16 %v556
    %v1997 = vunpack.c.l.b16 %v557
    %v1998 = vunpack.c.l.b16 %v558
    %v1999 = vunpack.c.l.b16 %v559
    %v2000 = vunpack.c.l.b16 %v560
    %v2001 = vunpack.c.l.b16 %v561
    %v2002 = vunpack.c.l.b16 %v562
    %v2003 = vunpack.c.l.b16 %v563
    %v2004 = vunpack.c.l.b16 %v564
    %v2005 = vunpack.c.l.b16 %v565
    %v2006 = vunpack.c.l.b16 %v566
    %v2007 = vunpack.c.l.b16 %v567
    %v2008 = vunpack.c.l.b16 %v568
    %v2009 = vunpack.c.l.b16 %v569
    %v2010 = vunpack.c.l.b16 %v570
    %v2011 = vunpack.c.l.b16 %v571
    %v2012 = vpack.c.b16 %v1629, %v1628
    %v2013 = vpack.c.b16 %v1631, %v1630
    %v2014 = vpack.c.b16 %v1633, %v1632
    %v2015 = vpack.c.b16 %v1635, %v1634
    %v2016 = vpack.c.b16 %v1637, %v1636
    %v2017 = vpack.c.b16 %v1639, %v1638
    %v2018 = vpack.c.b16 %v1641, %v1640
    %v2019 = vpack.c.b16 %v1643, %v1642
    %v2020 = vpack.c.b16 %v1645, %v1644
    %v2021 = vpack.c.b16 %v1647, %v1646
    %v2022 = vpack.c.b16 %v1649, %v1648
    %v2023 = vpack.c.b16 %v1651, %v1650
    %v2024 = vpack.c.b16 %v1653, %v1652
    %v2025 = vpack.c.b16 %v1655, %v1654
    %v2026 = vpack.c.b16 %v1657, %v1656
    %v2027 = vpack.c.b16 %v1659, %v1658
    %v2028 = vpack.c.b16 %v1661, %v1660
    %v2029 = vpack.c.b16 %v1663, %v1662
    %v2030 = vpack.c.b16 %v1665, %v1664
    %v2031 = vpack.c.b16 %v1667, %v1666
    %v2032 = vpack.c.b16 %v1669, %v1668
    %v2033 = vpack.c.b16 %v1671, %v1670
    %v2034 = vpack.c.b16 %v1673, %v1672
    %v2035 = vpack.c.b16 %v1675, %v1674
    %v2036 = vpack.c.b16 %v1677, %v1676
    %v2037 = vpack.c.b16 %v1679, %v1678
    %v2038 = vpack.c.b16 %v1681, %v1680
    %v2039 = vpack.c.b16 %v1683, %v1682
    %v2040 = vpack.c.b16 %v1685, %v1684
    %v2041 = vpack.c.b16 %v1687, %v1686
    %v2042 = vpack.c.b16 %v1689, %v1688
    %v2043 = vpack.c.b16 %v1691, %v1690
    %v2044 = vpack.c.b16 %v1693, %v1692
    %v2045 = vpack.c.b16 %v1695, %v1694
    %v2046 = vpack.c.b16 %v1697, %v1696
    %v2047 = vpack.c.b16 %v1699, %v1698
    %v2048 = vpack.c.b16 %v1701, %v1700
    %v2049 = vpack.c.b16 %v1703, %v1702
    %v2050 = vpack.c.b16 %v1705, %v1704
    %v2051 = vpack.c.b16 %v1707, %v1706
    %v2052 = vpack.c.b16 %v1709, %v1708
    %v2053 = vpack.c.b16 %v1711, %v1710
    %v2054 = vpack.c.b16 %v1713, %v1712
    %v2055 = vpack.c.b16 %v1715, %v1714
    %v2056 = vpack.c.b16 %v1717, %v1716
    %v2057 = vpack.c.b16 %v1719, %v1718
    %v2058 = vpack.c.b16 %v1721, %v1720
    %v2059 = vpack.c.b16 %v1723, %v1722
    %v2060 = vpack.c.b16 %v1725, %v1724
    %v2061 = vpack.c.b16 %v1727, %v1726
    %v2062 = vpack.c.b16 %v1729, %v1728
    %v2063 = vpack.c.b16 %v1731, %v1730
    %v2064 = vpack.c.b16 %v1733, %v1732
    %v2065 = vpack.c.b16 %v1735, %v1734
    %v2066 = vpack.c.b16 %v1737, %v1736
    %v2067 = vpack.c.b16 %v1739, %v1738
    %v2068 = vpack.c.b16 %v1741, %v1740
    %v2069 = vpack.c.b16 %v1743, %v1742
    %v2070 = vpack.c.b16 %v1745, %v1744
    %v2071 = vpack.c.b16 %v1747, %v1746
    %v2072 = vpack.c.b16 %v1749, %v1748
    %v2073 = vpack.c.b16 %v1751, %v1750
    %v2074 = vpack.c.b16 %v1753, %v1752
    %v2075 = vpack.c.b16 %v1755, %v1754
    %v2076 = vpack.c.b16 %v1757, %v1756
    %v2077 = vpack.c.b16 %v1759, %v1758
    %v2078 = vpack.c.b16 %v1761, %v1760
    %v2079 = vpack.c.b16 %v1763, %v1762
    %v2080 = vpack.c.b16 %v1765, %v1764
    %v2081 = vpack.c.b16 %v1767, %v1766
    %v2082 = vpack.c.b16 %v1769, %v1768
    %v2083 = vpack.c.b16 %v1771, %v1770
    %v2084 = vpack.c.b16 %v1773, %v1772
    %v2085 = vpack.c.b16 %v1775, %v1774
    %v2086 = vpack.c.b16 %v1777, %v1776
    %v2087 = vpack.c.b16 %v1779, %v1778
    %v2088 = vpack.c.b16 %v1781, %v1780
    %v2089 = vpack.c.b16 %v1783, %v1782
    %v2090 = vpack.c.b16 %v1785, %v1784
    %v2091 = vpack.c.b16 %v1787, %v1786
    %v2092 = vpack.c.b16 %v1789, %v1788
    %v2093 = vpack.c.b16 %v1791, %v1790
    %v2094 = vpack.c.b16 %v1793, %v1792
    %v2095 = vpack.c.b16 %v1795, %v1794
    %v2096 = vpack.c.b16 %v1797, %v1796
    %v2097 = vpack.c.b16 %v1799, %v1798
    %v2098 = vpack.c.b16 %v1801, %v1800
    %v2099 = vpack.c.b16 %v1803, %v1802
    %v2100 = vpack.c.b16 %v1805, %v1804
    %v2101 = vpack.c.b16 %v1807, %v1806
    %v2102 = vpack.c.b16 %v1809, %v1808
    %v2103 = vpack.c.b16 %v1811, %v1810
    %v2104 = vpack.c.b16 %v1813, %v1812
    %v2105 = vpack.c.b16 %v1815, %v1814
    %v2106 = vpack.c.b16 %v1817, %v1816
    %v2107 = vpack.c.b16 %v1819, %v1818
    %v2108 = vpack.c.b16 %v1821, %v1820
    %v2109 = vpack.c.b16 %v1823, %v1822
    %v2110 = vpack.c.b16 %v1825, %v1824
    %v2111 = vpack.c.b16 %v1827, %v1826
    %v2112 = vpack.c.b16 %v1829, %v1828
    %v2113 = vpack.c.b16 %v1831, %v1830
    %v2114 = vpack.c.b16 %v1833, %v1832
    %v2115 = vpack.c.b16 %v1835, %v1834
    %v2116 = vpack.c.b16 %v1837, %v1836
    %v2117 = vpack.c.b16 %v1839, %v1838
    %v2118 = vpack.c.b16 %v1841, %v1840
    %v2119 = vpack.c.b16 %v1843, %v1842
    %v2120 = vpack.c.b16 %v1845, %v1844
    %v2121 = vpack.c.b16 %v1847, %v1846
    %v2122 = vpack.c.b16 %v1849, %v1848
    %v2123 = vpack.c.b16 %v1851, %v1850
    %v2124 = vpack.c.b16 %v1853, %v1852
    %v2125 = vpack.c.b16 %v1855, %v1854
    %v2126 = vpack.c.b16 %v1857, %v1856
    %v2127 = vpack.c.b16 %v1859, %v1858
    %v2128 = vpack.c.b16 %v1861, %v1860
    %v2129 = vpack.c.b16 %v1863, %v1862
    %v2130 = vpack.c.b16 %v1865, %v1864
    %v2131 = vpack.c.b16 %v1867, %v1866
    %v2132 = vpack.c.b16 %v1869, %v1868
    %v2133 = vpack.c.b16 %v1871, %v1870
    %v2134 = vpack.c.b16 %v1873, %v1872
    %v2135 = vpack.c.b16 %v1875, %v1874
    %v2136 = vpack.c.b16 %v1877, %v1876
    %v2137 = vpack.c.b16 %v1879, %v1878
    %v2138 = vpack.c.b16 %v1881, %v1880
    %v2139 = vpack.c.b16 %v1883, %v1882
    %v2140 = vpack.c.b16 %v1885, %v1884
    %v2141 = vpack.c.b16 %v1887, %v1886
    %v2142 = vpack.c.b16 %v1889, %v1888
    %v2143 = vpack.c.b16 %v1891, %v1890
    %v2144 = vpack.c.b16 %v1893, %v1892
    %v2145 = vpack.c.b16 %v1895, %v1894
    %v2146 = vpack.c.b16 %v1897, %v1896
    %v2147 = vpack.c.b16 %v1899, %v1898
    %v2148 = vpack.c.b16 %v1901, %v1900
    %v2149 = vpack.c.b16 %v1903, %v1902
    %v2150 = vpack.c.b16 %v1905, %v1904
    %v2151 = vpack.c.b16 %v1907, %v1906
    %v2152 = vpack.c.b16 %v1909, %v1908
    %v2153 = vpack.c.b16 %v1911, %v1910
    %v2154 = vpack.c.b16 %v1913, %v1912
    %v2155 = vpack.c.b16 %v1915, %v1914
    %v2156 = vpack.c.b16 %v1917, %v1916
    %v2157 = vpack.c.b16 %v1919, %v1918
    %v2158 = vpack.c.b16 %v1921, %v1920
    %v2159 = vpack.c.b16 %v1923, %v1922
    %v2160 = vpack.c.b16 %v1925, %v1924
    %v2161 = vpack.c.b16 %v1927, %v1926
    %v2162 = vpack.c.b16 %v1929, %v1928
    %v2163 = vpack.c.b16 %v1931, %v1930
    %v2164 = vpack.c.b16 %v1933, %v1932
    %v2165 = vpack.c.b16 %v1935, %v1934
    %v2166 = vpack.c.b16 %v1937, %v1936
    %v2167 = vpack.c.b16 %v1939, %v1938
    %v2168 = vpack.c.b16 %v1941, %v1940
    %v2169 = vpack.c.b16 %v1943, %v1942
    %v2170 = vpack.c.b16 %v1945, %v1944
    %v2171 = vpack.c.b16 %v1947, %v1946
    %v2172 = vpack.c.b16 %v1949, %v1948
    %v2173 = vpack.c.b16 %v1951, %v1950
    %v2174 = vpack.c.b16 %v1953, %v1952
    %v2175 = vpack.c.b16 %v1955, %v1954
    %v2176 = vpack.c.b16 %v1957, %v1956
    %v2177 = vpack.c.b16 %v1959, %v1958
    %v2178 = vpack.c.b16 %v1961, %v1960
    %v2179 = vpack.c.b16 %v1963, %v1962
    %v2180 = vpack.c.b16 %v1965, %v1964
    %v2181 = vpack.c.b16 %v1967, %v1966
    %v2182 = vpack.c.b16 %v1969, %v1968
    %v2183 = vpack.c.b16 %v1971, %v1970
    %v2184 = vpack.c.b16 %v1973, %v1972
    %v2185 = vpack.c.b16 %v1975, %v1974
    %v2186 = vpack.c.b16 %v1977, %v1976
    %v2187 = vpack.c.b16 %v1979, %v1978
    %v2188 = vpack.c.b16 %v1981, %v1980
    %v2189 = vpack.c.b16 %v1983, %v1982
    %v2190 = vpack.c.b16 %v1985, %v1984
    %v2191 = vpack.c.b16 %v1987, %v1986
    %v2192 = vpack.c.b16 %v1989, %v1988
    %v2193 = vpack.c.b16 %v1991, %v1990
    %v2194 = vpack.c.b16 %v1993, %v1992
    %v2195 = vpack.c.b16 %v1995, %v1994
    %v2196 = vpack.c.b16 %v1997, %v1996
    %v2197 = vpack.c.b16 %v1999, %v1998
    %v2198 = vpack.c.b16 %v2001, %v2000
    %v2199 = vpack.c.b16 %v2003, %v2002
    %v2200 = vpack.c.b16 %v2005, %v2004
    %v2201 = vpack.c.b16 %v2007, %v2006
    %v2202 = vpack.c.b16 %v2009, %v2008
    %v2203 = vpack.c.b16 %v2011, %v2010
    %2396 = vmatprep.subr.bf16.mxu0 0
    %2397 = vmatpush1.bf16.msra.mxu0 %v2012
    %2398 = vmatprep.subr.bf16.mxu0 0
    %2399 = vmatpush1.bf16.msra.mxu0 %v2013
    %2400 = vmatprep.subr.bf16.mxu0 0
    %2401 = vmatpush1.bf16.msra.mxu0 %v2014
    %2402 = vmatprep.subr.bf16.mxu0 0
    %2403 = vmatpush1.bf16.msra.mxu0 %v2015
    %2404 = vmatprep.subr.bf16.mxu0 0
    %2405 = vmatpush1.bf16.msra.mxu0 %v2016
    %2406 = vmatprep.subr.bf16.mxu0 0
    %2407 = vmatpush1.bf16.msra.mxu0 %v2017
    %2408 = vmatprep.subr.bf16.mxu0 0
    %2409 = vmatpush1.bf16.msra.mxu0 %v2018
    %2410 = vmatprep.subr.bf16.mxu0 0
    %2411 = vmatpush1.bf16.msra.mxu0 %v2019
    %2412 = vmatprep.subr.bf16.mxu0 0
    %2413 = vmatpush1.bf16.msra.mxu0 %v2020
    %2414 = vmatprep.subr.bf16.mxu0 0
    %2415 = vmatpush1.bf16.msra.mxu0 %v2021
    %2416 = vmatprep.subr.bf16.mxu0 0
    %2417 = vmatpush1.bf16.msra.mxu0 %v2022
    %2418 = vmatprep.subr.bf16.mxu0 0
    %2419 = vmatpush1.bf16.msra.mxu0 %v2023
    %2420 = vmatprep.subr.bf16.mxu0 0
    %2421 = vmatpush1.bf16.msra.mxu0 %v2024
    %2422 = vmatprep.subr.bf16.mxu0 0
    %2423 = vmatpush1.bf16.msra.mxu0 %v2025
    %2424 = vmatprep.subr.bf16.mxu0 0
    %2425 = vmatpush1.bf16.msra.mxu0 %v2026
    %2426 = vmatprep.subr.bf16.mxu0 0
    %2427 = vmatpush1.bf16.msra.mxu0 %v2027
    %2428 = vmatprep.mubr.bf16.mxu0 %v141
    %2429 = vmatmul.mubr.bf16.gmra.mrb[0].mxu0 %v140
    %v2430 = vpop.f32.mrb[0].mxu0
    %v2431 = vadd.f32 %v1239, %v2430
    %v2432 = vpop.f32.mrb[0].mxu0
    %v2433 = vpop.f32.mrb[0].mxu0
    %v2434 = vpop.f32.mrb[0].mxu0
    %2435 = vdwg.mxu0
    %2436 = vmatprep.subr.bf16.mxu0 0
    %2437 = vmatpush1.bf16.msra.mxu0 %v2028
    %2438 = vmatprep.subr.bf16.mxu0 0
    %2439 = vmatpush1.bf16.msra.mxu0 %v2029
    %2440 = vmatprep.subr.bf16.mxu0 0
    %2441 = vmatpush1.bf16.msra.mxu0 %v2030
    %2442 = vmatprep.subr.bf16.mxu0 0
    %2443 = vmatpush1.bf16.msra.mxu0 %v2031
    %2444 = vmatprep.subr.bf16.mxu0 0
    %2445 = vmatpush1.bf16.msra.mxu0 %v2032
    %2446 = vmatprep.subr.bf16.mxu0 0
    %2447 = vmatpush1.bf16.msra.mxu0 %v2033
    %2448 = vmatprep.subr.bf16.mxu0 0
    %2449 = vmatpush1.bf16.msra.mxu0 %v2034
    %2450 = vmatprep.subr.bf16.mxu0 0
    %2451 = vmatpush1.bf16.msra.mxu0 %v2035
    %2452 = vmatprep.subr.bf16.mxu0 0
    %2453 = vmatpush1.bf16.msra.mxu0 %v2036
    %2454 = vmatprep.subr.bf16.mxu0 0
    %2455 = vmatpush1.bf16.msra.mxu0 %v2037
    %2456 = vmatprep.subr.bf16.mxu0 0
    %2457 = vmatpush1.bf16.msra.mxu0 %v2038
    %2458 = vmatprep.subr.bf16.mxu0 0
    %2459 = vmatpush1.bf16.msra.mxu0 %v2039
    %2460 = vmatprep.subr.bf16.mxu0 0
    %2461 = vmatpush1.bf16.msra.mxu0 %v2040
    %2462 = vmatprep.subr.bf16.mxu0 0
    %2463 = vmatpush1.bf16.msra.mxu0 %v2041
    %2464 = vmatprep.subr.bf16.mxu0 0
    %2465 = vmatpush1.bf16.msra.mxu0 %v2042
    %2466 = vmatprep.subr.bf16.mxu0 0
    %2467 = vmatpush1.bf16.msra.mxu0 %v2043
    %2468 = vmatprep.mubr.bf16.mxu0 %v143
    %2469 = vmatmul.mubr.bf16.gmra.mrb[0].mxu0 %v142
    %v2470 = vpop.f32.mrb[0].mxu0
    %v2471 = vadd.f32 %v2431, %v2470
    %v2472 = vpop.f32.mrb[0].mxu0
    %v2473 = vpop.f32.mrb[0].mxu0
    %v2474 = vpop.f32.mrb[0].mxu0
    %2475 = vdwg.mxu0
    %2476 = vmatprep.subr.bf16.mxu0 0
    %2477 = vmatpush1.bf16.msra.mxu0 %v2044
    %2478 = vmatprep.subr.bf16.mxu0 0
    %2479 = vmatpush1.bf16.msra.mxu0 %v2045
    %2480 = vmatprep.subr.bf16.mxu0 0
    %2481 = vmatpush1.bf16.msra.mxu0 %v2046
    %2482 = vmatprep.subr.bf16.mxu0 0
    %2483 = vmatpush1.bf16.msra.mxu0 %v2047
    %2484 = vmatprep.subr.bf16.mxu0 0
    %2485 = vmatpush1.bf16.msra.mxu0 %v2048
    %2486 = vmatprep.subr.bf16.mxu0 0
    %2487 = vmatpush1.bf16.msra.mxu0 %v2049
    %2488 = vmatprep.subr.bf16.mxu0 0
    %2489 = vmatpush1.bf16.msra.mxu0 %v2050
    %2490 = vmatprep.subr.bf16.mxu0 0
    %2491 = vmatpush1.bf16.msra.mxu0 %v2051
    %2492 = vmatprep.subr.bf16.mxu0 0
    %2493 = vmatpush1.bf16.msra.mxu0 %v2052
    %2494 = vmatprep.subr.bf16.mxu0 0
    %2495 = vmatpush1.bf16.msra.mxu0 %v2053
    %2496 = vmatprep.subr.bf16.mxu0 0
    %2497 = vmatpush1.bf16.msra.mxu0 %v2054
    %2498 = vmatprep.subr.bf16.mxu0 0
    %2499 = vmatpush1.bf16.msra.mxu0 %v2055
    %2500 = vmatprep.subr.bf16.mxu0 0
    %2501 = vmatpush1.bf16.msra.mxu0 %v2056
    %2502 = vmatprep.subr.bf16.mxu0 0
    %2503 = vmatpush1.bf16.msra.mxu0 %v2057
    %2504 = vmatprep.subr.bf16.mxu0 0
    %2505 = vmatpush1.bf16.msra.mxu0 %v2058
    %2506 = vmatprep.subr.bf16.mxu0 0
    %2507 = vmatpush1.bf16.msra.mxu0 %v2059
    %2508 = vmatprep.mubr.bf16.mxu0 %v145
    %2509 = vmatmul.mubr.bf16.gmra.mrb[0].mxu0 %v144
    %v2510 = vpop.f32.mrb[0].mxu0
    %v2511 = vadd.f32 %v2471, %v2510
    %v2512 = vpop.f32.mrb[0].mxu0
    %v2513 = vpop.f32.mrb[0].mxu0
    %v2514 = vpop.f32.mrb[0].mxu0
    %2515 = vdwg.mxu0
    %2516 = vmatprep.subr.bf16.mxu0 0
    %2517 = vmatpush1.bf16.msra.mxu0 %v2060
    %2518 = vmatprep.subr.bf16.mxu0 0
    %2519 = vmatpush1.bf16.msra.mxu0 %v2061
    %2520 = vmatprep.subr.bf16.mxu0 0
    %2521 = vmatpush1.bf16.msra.mxu0 %v2062
    %2522 = vmatprep.subr.bf16.mxu0 0
    %2523 = vmatpush1.bf16.msra.mxu0 %v2063
    %2524 = vmatprep.subr.bf16.mxu0 0
    %2525 = vmatpush1.bf16.msra.mxu0 %v2064
    %2526 = vmatprep.subr.bf16.mxu0 0
    %2527 = vmatpush1.bf16.msra.mxu0 %v2065
    %2528 = vmatprep.subr.bf16.mxu0 0
    %2529 = vmatpush1.bf16.msra.mxu0 %v2066
    %2530 = vmatprep.subr.bf16.mxu0 0
    %2531 = vmatpush1.bf16.msra.mxu0 %v2067
    %2532 = vmatprep.subr.bf16.mxu0 0
    %2533 = vmatpush1.bf16.msra.mxu0 %v2068
    %2534 = vmatprep.subr.bf16.mxu0 0
    %2535 = vmatpush1.bf16.msra.mxu0 %v2069
    %2536 = vmatprep.subr.bf16.mxu0 0
    %2537 = vmatpush1.bf16.msra.mxu0 %v2070
    %2538 = vmatprep.subr.bf16.mxu0 0
    %2539 = vmatpush1.bf16.msra.mxu0 %v2071
    %2540 = vmatprep.subr.bf16.mxu0 0
    %2541 = vmatpush1.bf16.msra.mxu0 %v2072
    %2542 = vmatprep.subr.bf16.mxu0 0
    %2543 = vmatpush1.bf16.msra.mxu0 %v2073
    %2544 = vmatprep.subr.bf16.mxu0 0
    %2545 = vmatpush1.bf16.msra.mxu0 %v2074
    %2546 = vmatprep.subr.bf16.mxu0 0
    %2547 = vmatpush1.bf16.msra.mxu0 %v2075
    %2548 = vmatprep.mubr.bf16.mxu0 %v147
    %2549 = vmatmul.mubr.bf16.gmra.mrb[0].mxu0 %v146
    %v2550 = vpop.f32.mrb[0].mxu0
    %v2551 = vadd.f32 %v2511, %v2550
    %v2552 = vpop.f32.mrb[0].mxu0
    %v2553 = vpop.f32.mrb[0].mxu0
    %v2554 = vpop.f32.mrb[0].mxu0
    %2555 = vdwg.mxu0
    %2556 = vmatprep.subr.bf16.mxu0 0
    %2557 = vmatpush1.bf16.msra.mxu0 %v2076
    %2558 = vmatprep.subr.bf16.mxu0 0
    %2559 = vmatpush1.bf16.msra.mxu0 %v2077
    %2560 = vmatprep.subr.bf16.mxu0 0
    %2561 = vmatpush1.bf16.msra.mxu0 %v2078
    %2562 = vmatprep.subr.bf16.mxu0 0
    %2563 = vmatpush1.bf16.msra.mxu0 %v2079
    %2564 = vmatprep.subr.bf16.mxu0 0
    %2565 = vmatpush1.bf16.msra.mxu0 %v2080
    %2566 = vmatprep.subr.bf16.mxu0 0
    %2567 = vmatpush1.bf16.msra.mxu0 %v2081
    %2568 = vmatprep.subr.bf16.mxu0 0
    %2569 = vmatpush1.bf16.msra.mxu0 %v2082
    %2570 = vmatprep.subr.bf16.mxu0 0
    %2571 = vmatpush1.bf16.msra.mxu0 %v2083
    %2572 = vmatprep.subr.bf16.mxu0 0
    %2573 = vmatpush1.bf16.msra.mxu0 %v2084
    %2574 = vmatprep.subr.bf16.mxu0 0
    %2575 = vmatpush1.bf16.msra.mxu0 %v2085
    %2576 = vmatprep.subr.bf16.mxu0 0
    %2577 = vmatpush1.bf16.msra.mxu0 %v2086
    %2578 = vmatprep.subr.bf16.mxu0 0
    %2579 = vmatpush1.bf16.msra.mxu0 %v2087
    %2580 = vmatprep.subr.bf16.mxu0 0
    %2581 = vmatpush1.bf16.msra.mxu0 %v2088
    %2582 = vmatprep.subr.bf16.mxu0 0
    %2583 = vmatpush1.bf16.msra.mxu0 %v2089
    %2584 = vmatprep.subr.bf16.mxu0 0
    %2585 = vmatpush1.bf16.msra.mxu0 %v2090
    %2586 = vmatprep.subr.bf16.mxu0 0
    %2587 = vmatpush1.bf16.msra.mxu0 %v2091
    %2588 = vmatprep.mubr.bf16.mxu0 %v149
    %2589 = vmatmul.mubr.bf16.gmra.mrb[0].mxu0 %v148
    %v2590 = vpop.f32.mrb[0].mxu0
    %v2591 = vadd.f32 %v2551, %v2590
    %v2592 = vpop.f32.mrb[0].mxu0
    %v2593 = vpop.f32.mrb[0].mxu0
    %v2594 = vpop.f32.mrb[0].mxu0
    %2595 = vdwg.mxu0
    %2596 = vmatprep.subr.bf16.mxu0 0
    %2597 = vmatpush1.bf16.msra.mxu0 %v2092
    %2598 = vmatprep.subr.bf16.mxu0 0
    %2599 = vmatpush1.bf16.msra.mxu0 %v2093
    %2600 = vmatprep.subr.bf16.mxu0 0
    %2601 = vmatpush1.bf16.msra.mxu0 %v2094
    %2602 = vmatprep.subr.bf16.mxu0 0
    %2603 = vmatpush1.bf16.msra.mxu0 %v2095
    %2604 = vmatprep.subr.bf16.mxu0 0
    %2605 = vmatpush1.bf16.msra.mxu0 %v2096
    %2606 = vmatprep.subr.bf16.mxu0 0
    %2607 = vmatpush1.bf16.msra.mxu0 %v2097
    %2608 = vmatprep.subr.bf16.mxu0 0
    %2609 = vmatpush1.bf16.msra.mxu0 %v2098
    %2610 = vmatprep.subr.bf16.mxu0 0
    %2611 = vmatpush1.bf16.msra.mxu0 %v2099
    %2612 = vmatprep.subr.bf16.mxu0 0
    %2613 = vmatpush1.bf16.msra.mxu0 %v2100
    %2614 = vmatprep.subr.bf16.mxu0 0
    %2615 = vmatpush1.bf16.msra.mxu0 %v2101
    %2616 = vmatprep.subr.bf16.mxu0 0
    %2617 = vmatpush1.bf16.msra.mxu0 %v2102
    %2618 = vmatprep.subr.bf16.mxu0 0
    %2619 = vmatpush1.bf16.msra.mxu0 %v2103
    %2620 = vmatprep.subr.bf16.mxu0 0
    %2621 = vmatpush1.bf16.msra.mxu0 %v2104
    %2622 = vmatprep.subr.bf16.mxu0 0
    %2623 = vmatpush1.bf16.msra.mxu0 %v2105
    %2624 = vmatprep.subr.bf16.mxu0 0
    %2625 = vmatpush1.bf16.msra.mxu0 %v2106
    %2626 = vmatprep.subr.bf16.mxu0 0
    %2627 = vmatpush1.bf16.msra.mxu0 %v2107
    %2628 = vmatprep.mubr.bf16.mxu0 %v151
    %2629 = vmatmul.mubr.bf16.gmra.mrb[0].mxu0 %v150
    %v2630 = vpop.f32.mrb[0].mxu0
    %v2631 = vadd.f32 %v2591, %v2630
    %v2632 = vpop.f32.mrb[0].mxu0
    %v2633 = vpop.f32.mrb[0].mxu0
    %v2634 = vpop.f32.mrb[0].mxu0
    %2635 = vdwg.mxu0
    %2636 = vmatprep.subr.bf16.mxu0 0
    %2637 = vmatpush1.bf16.msra.mxu0 %v2108
    %2638 = vmatprep.subr.bf16.mxu0 0
    %2639 = vmatpush1.bf16.msra.mxu0 %v2109
    %2640 = vmatprep.subr.bf16.mxu0 0
    %2641 = vmatpush1.bf16.msra.mxu0 %v2110
    %2642 = vmatprep.subr.bf16.mxu0 0
    %2643 = vmatpush1.bf16.msra.mxu0 %v2111
    %2644 = vmatprep.subr.bf16.mxu0 0
    %2645 = vmatpush1.bf16.msra.mxu0 %v2112
    %2646 = vmatprep.subr.bf16.mxu0 0
    %2647 = vmatpush1.bf16.msra.mxu0 %v2113
    %2648 = vmatprep.subr.bf16.mxu0 0
    %2649 = vmatpush1.bf16.msra.mxu0 %v2114
    %2650 = vmatprep.subr.bf16.mxu0 0
    %2651 = vmatpush1.bf16.msra.mxu0 %v2115
    %2652 = vmatprep.subr.bf16.mxu0 0
    %2653 = vmatpush1.bf16.msra.mxu0 %v2116
    %2654 = vmatprep.subr.bf16.mxu0 0
    %2655 = vmatpush1.bf16.msra.mxu0 %v2117
    %2656 = vmatprep.subr.bf16.mxu0 0
    %2657 = vmatpush1.bf16.msra.mxu0 %v2118
    %2658 = vmatprep.subr.bf16.mxu0 0
    %2659 = vmatpush1.bf16.msra.mxu0 %v2119
    %2660 = vmatprep.subr.bf16.mxu0 0
    %2661 = vmatpush1.bf16.msra.mxu0 %v2120
    %2662 = vmatprep.subr.bf16.mxu0 0
    %2663 = vmatpush1.bf16.msra.mxu0 %v2121
    %2664 = vmatprep.subr.bf16.mxu0 0
    %2665 = vmatpush1.bf16.msra.mxu0 %v2122
    %2666 = vmatprep.subr.bf16.mxu0 0
    %2667 = vmatpush1.bf16.msra.mxu0 %v2123
    %2668 = vmatprep.mubr.bf16.mxu0 %v153
    %2669 = vmatmul.mubr.bf16.gmra.mrb[0].mxu0 %v152
    %v2670 = vpop.f32.mrb[0].mxu0
    %v2671 = vadd.f32 %v2631, %v2670
    %v2672 = vpop.f32.mrb[0].mxu0
    %v2673 = vpop.f32.mrb[0].mxu0
    %v2674 = vpop.f32.mrb[0].mxu0
    %2675 = vdwg.mxu0
    %2676 = vmatprep.subr.bf16.mxu0 0
    %2677 = vmatpush1.bf16.msra.mxu0 %v2124
    %2678 = vmatprep.subr.bf16.mxu0 0
    %2679 = vmatpush1.bf16.msra.mxu0 %v2125
    %2680 = vmatprep.subr.bf16.mxu0 0
    %2681 = vmatpush1.bf16.msra.mxu0 %v2126
    %2682 = vmatprep.subr.bf16.mxu0 0
    %2683 = vmatpush1.bf16.msra.mxu0 %v2127
    %2684 = vmatprep.subr.bf16.mxu0 0
    %2685 = vmatpush1.bf16.msra.mxu0 %v2128
    %2686 = vmatprep.subr.bf16.mxu0 0
    %2687 = vmatpush1.bf16.msra.mxu0 %v2129
    %2688 = vmatprep.subr.bf16.mxu0 0
    %2689 = vmatpush1.bf16.msra.mxu0 %v2130
    %2690 = vmatprep.subr.bf16.mxu0 0
    %2691 = vmatpush1.bf16.msra.mxu0 %v2131
    %2692 = vmatprep.subr.bf16.mxu0 0
    %2693 = vmatpush1.bf16.msra.mxu0 %v2132
    %2694 = vmatprep.subr.bf16.mxu0 0
    %2695 = vmatpush1.bf16.msra.mxu0 %v2133
    %2696 = vmatprep.subr.bf16.mxu0 0
    %2697 = vmatpush1.bf16.msra.mxu0 %v2134
    %2698 = vmatprep.subr.bf16.mxu0 0
    %2699 = vmatpush1.bf16.msra.mxu0 %v2135
    %2700 = vmatprep.subr.bf16.mxu0 0
    %2701 = vmatpush1.bf16.msra.mxu0 %v2136
    %2702 = vmatprep.subr.bf16.mxu0 0
    %2703 = vmatpush1.bf16.msra.mxu0 %v2137
    %2704 = vmatprep.subr.bf16.mxu0 0
    %2705 = vmatpush1.bf16.msra.mxu0 %v2138
    %2706 = vmatprep.subr.bf16.mxu0 0
    %2707 = vmatpush1.bf16.msra.mxu0 %v2139
    %2708 = vmatprep.mubr.bf16.mxu0 %v155
    %2709 = vmatmul.mubr.bf16.gmra.mrb[0].mxu0 %v154
    %v2710 = vpop.f32.mrb[0].mxu0
    %v2711 = vadd.f32 %v2671, %v2710
    %v2712 = vpop.f32.mrb[0].mxu0
    %v2713 = vpop.f32.mrb[0].mxu0
    %v2714 = vpop.f32.mrb[0].mxu0
    %2715 = vdwg.mxu0
    %2716 = vmatprep.subr.bf16.mxu0 0
    %2717 = vmatpush1.bf16.msra.mxu0 %v2140
    %2718 = vmatprep.subr.bf16.mxu0 0
    %2719 = vmatpush1.bf16.msra.mxu0 %v2141
    %2720 = vmatprep.subr.bf16.mxu0 0
    %2721 = vmatpush1.bf16.msra.mxu0 %v2142
    %2722 = vmatprep.subr.bf16.mxu0 0
    %2723 = vmatpush1.bf16.msra.mxu0 %v2143
    %2724 = vmatprep.subr.bf16.mxu0 0
    %2725 = vmatpush1.bf16.msra.mxu0 %v2144
    %2726 = vmatprep.subr.bf16.mxu0 0
    %2727 = vmatpush1.bf16.msra.mxu0 %v2145
    %2728 = vmatprep.subr.bf16.mxu0 0
    %2729 = vmatpush1.bf16.msra.mxu0 %v2146
    %2730 = vmatprep.subr.bf16.mxu0 0
    %2731 = vmatpush1.bf16.msra.mxu0 %v2147
    %2732 = vmatprep.subr.bf16.mxu0 0
    %2733 = vmatpush1.bf16.msra.mxu0 %v2148
    %2734 = vmatprep.subr.bf16.mxu0 0
    %2735 = vmatpush1.bf16.msra.mxu0 %v2149
    %2736 = vmatprep.subr.bf16.mxu0 0
    %2737 = vmatpush1.bf16.msra.mxu0 %v2150
    %2738 = vmatprep.subr.bf16.mxu0 0
    %2739 = vmatpush1.bf16.msra.mxu0 %v2151
    %2740 = vmatprep.subr.bf16.mxu0 0
    %2741 = vmatpush1.bf16.msra.mxu0 %v2152
    %2742 = vmatprep.subr.bf16.mxu0 0
    %2743 = vmatpush1.bf16.msra.mxu0 %v2153
    %2744 = vmatprep.subr.bf16.mxu0 0
    %2745 = vmatpush1.bf16.msra.mxu0 %v2154
    %2746 = vmatprep.subr.bf16.mxu0 0
    %2747 = vmatpush1.bf16.msra.mxu0 %v2155
    %2748 = vmatprep.mubr.bf16.mxu0 %v157
    %2749 = vmatmul.mubr.bf16.gmra.mrb[0].mxu0 %v156
    %v2750 = vpop.f32.mrb[0].mxu0
    %v2751 = vadd.f32 %v2711, %v2750
    %v2752 = vpop.f32.mrb[0].mxu0
    %v2753 = vpop.f32.mrb[0].mxu0
    %v2754 = vpop.f32.mrb[0].mxu0
    %2755 = vdwg.mxu0
    %2756 = vmatprep.subr.bf16.mxu0 0
    %2757 = vmatpush1.bf16.msra.mxu0 %v2156
    %2758 = vmatprep.subr.bf16.mxu0 0
    %2759 = vmatpush1.bf16.msra.mxu0 %v2157
    %2760 = vmatprep.subr.bf16.mxu0 0
    %2761 = vmatpush1.bf16.msra.mxu0 %v2158
    %2762 = vmatprep.subr.bf16.mxu0 0
    %2763 = vmatpush1.bf16.msra.mxu0 %v2159
    %2764 = vmatprep.subr.bf16.mxu0 0
    %2765 = vmatpush1.bf16.msra.mxu0 %v2160
    %2766 = vmatprep.subr.bf16.mxu0 0
    %2767 = vmatpush1.bf16.msra.mxu0 %v2161
    %2768 = vmatprep.subr.bf16.mxu0 0
    %2769 = vmatpush1.bf16.msra.mxu0 %v2162
    %2770 = vmatprep.subr.bf16.mxu0 0
    %2771 = vmatpush1.bf16.msra.mxu0 %v2163
    %2772 = vmatprep.subr.bf16.mxu0 0
    %2773 = vmatpush1.bf16.msra.mxu0 %v2164
    %2774 = vmatprep.subr.bf16.mxu0 0
    %2775 = vmatpush1.bf16.msra.mxu0 %v2165
    %2776 = vmatprep.subr.bf16.mxu0 0
    %2777 = vmatpush1.bf16.msra.mxu0 %v2166
    %2778 = vmatprep.subr.bf16.mxu0 0
    %2779 = vmatpush1.bf16.msra.mxu0 %v2167
    %2780 = vmatprep.subr.bf16.mxu0 0
    %2781 = vmatpush1.bf16.msra.mxu0 %v2168
    %2782 = vmatprep.subr.bf16.mxu0 0
    %2783 = vmatpush1.bf16.msra.mxu0 %v2169
    %2784 = vmatprep.subr.bf16.mxu0 0
    %2785 = vmatpush1.bf16.msra.mxu0 %v2170
    %2786 = vmatprep.subr.bf16.mxu0 0
    %2787 = vmatpush1.bf16.msra.mxu0 %v2171
    %2788 = vmatprep.mubr.bf16.mxu0 %v159
    %2789 = vmatmul.mubr.bf16.gmra.mrb[0].mxu0 %v158
    %v2790 = vpop.f32.mrb[0].mxu0
    %v2791 = vadd.f32 %v2751, %v2790
    %v2792 = vpop.f32.mrb[0].mxu0
    %v2793 = vpop.f32.mrb[0].mxu0
    %v2794 = vpop.f32.mrb[0].mxu0
    %2795 = vdwg.mxu0
    %2796 = vmatprep.subr.bf16.mxu0 0
    %2797 = vmatpush1.bf16.msra.mxu0 %v2172
    %2798 = vmatprep.subr.bf16.mxu0 0
    %2799 = vmatpush1.bf16.msra.mxu0 %v2173
    %2800 = vmatprep.subr.bf16.mxu0 0
    %2801 = vmatpush1.bf16.msra.mxu0 %v2174
    %2802 = vmatprep.subr.bf16.mxu0 0
    %2803 = vmatpush1.bf16.msra.mxu0 %v2175
    %2804 = vmatprep.subr.bf16.mxu0 0
    %2805 = vmatpush1.bf16.msra.mxu0 %v2176
    %2806 = vmatprep.subr.bf16.mxu0 0
    %2807 = vmatpush1.bf16.msra.mxu0 %v2177
    %2808 = vmatprep.subr.bf16.mxu0 0
    %2809 = vmatpush1.bf16.msra.mxu0 %v2178
    %2810 = vmatprep.subr.bf16.mxu0 0
    %2811 = vmatpush1.bf16.msra.mxu0 %v2179
    %2812 = vmatprep.subr.bf16.mxu0 0
    %2813 = vmatpush1.bf16.msra.mxu0 %v2180
    %2814 = vmatprep.subr.bf16.mxu0 0
    %2815 = vmatpush1.bf16.msra.mxu0 %v2181
    %2816 = vmatprep.subr.bf16.mxu0 0
    %2817 = vmatpush1.bf16.msra.mxu0 %v2182
    %2818 = vmatprep.subr.bf16.mxu0 0
    %2819 = vmatpush1.bf16.msra.mxu0 %v2183
    %2820 = vmatprep.subr.bf16.mxu0 0
    %2821 = vmatpush1.bf16.msra.mxu0 %v2184
    %2822 = vmatprep.subr.bf16.mxu0 0
    %2823 = vmatpush1.bf16.msra.mxu0 %v2185
    %2824 = vmatprep.subr.bf16.mxu0 0
    %2825 = vmatpush1.bf16.msra.mxu0 %v2186
    %2826 = vmatprep.subr.bf16.mxu0 0
    %2827 = vmatpush1.bf16.msra.mxu0 %v2187
    %2828 = vmatprep.mubr.bf16.mxu0 %v161
    %2829 = vmatmul.mubr.bf16.gmra.mrb[0].mxu0 %v160
    %v2830 = vpop.f32.mrb[0].mxu0
    %v2831 = vadd.f32 %v2791, %v2830
    %v2832 = vpop.f32.mrb[0].mxu0
    %v2833 = vpop.f32.mrb[0].mxu0
    %v2834 = vpop.f32.mrb[0].mxu0
    %2835 = vdwg.mxu0
    %2836 = vmatprep.subr.bf16.mxu0 0
    %2837 = vmatpush1.bf16.msra.mxu0 %v2188
    %2838 = vmatprep.subr.bf16.mxu0 0
    %2839 = vmatpush1.bf16.msra.mxu0 %v2189
    %2840 = vmatprep.subr.bf16.mxu0 0
    %2841 = vmatpush1.bf16.msra.mxu0 %v2190
    %2842 = vmatprep.subr.bf16.mxu0 0
    %2843 = vmatpush1.bf16.msra.mxu0 %v2191
    %2844 = vmatprep.subr.bf16.mxu0 0
    %2845 = vmatpush1.bf16.msra.mxu0 %v2192
    %2846 = vmatprep.subr.bf16.mxu0 0
    %2847 = vmatpush1.bf16.msra.mxu0 %v2193
    %2848 = vmatprep.subr.bf16.mxu0 0
    %2849 = vmatpush1.bf16.msra.mxu0 %v2194
    %2850 = vmatprep.subr.bf16.mxu0 0
    %2851 = vmatpush1.bf16.msra.mxu0 %v2195
    %2852 = vmatprep.subr.bf16.mxu0 0
    %2853 = vmatpush1.bf16.msra.mxu0 %v2196
    %2854 = vmatprep.subr.bf16.mxu0 0
    %2855 = vmatpush1.bf16.msra.mxu0 %v2197
    %2856 = vmatprep.subr.bf16.mxu0 0
    %2857 = vmatpush1.bf16.msra.mxu0 %v2198
    %2858 = vmatprep.subr.bf16.mxu0 0
    %2859 = vmatpush1.bf16.msra.mxu0 %v2199
    %2860 = vmatprep.subr.bf16.mxu0 0
    %2861 = vmatpush1.bf16.msra.mxu0 %v2200
    %2862 = vmatprep.subr.bf16.mxu0 0
    %2863 = vmatpush1.bf16.msra.mxu0 %v2201
    %2864 = vmatprep.subr.bf16.mxu0 0
    %2865 = vmatpush1.bf16.msra.mxu0 %v2202
    %2866 = vmatprep.subr.bf16.mxu0 0
    %2867 = vmatpush1.bf16.msra.mxu0 %v2203
    %2868 = vmatprep.mubr.bf16.mxu0 %v163
    %2869 = vmatmul.mubr.bf16.gmra.mrb[0].mxu0 %v162
    %v2870 = vpop.f32.mrb[0].mxu0
    %v2871 = vadd.f32 %v2831, %v2870
    %v2872 = vpop.f32.mrb[0].mxu0
    %v2873 = vpop.f32.mrb[0].mxu0
    %v2874 = vpop.f32.mrb[0].mxu0
    %2875 = vdwg.mxu0
    %v2876 = vld [vmem:[%s4] sm:$0x1]
    %v2878 = vlaneseq
    %v2879 = vshrl.u32 %v2878, 7
    %v2880 = vsub.s32 0, %v2879
    %v2881 = vrot.slane %v2876, %v2880
    %v2883 = vadd.f32 %v2871, %v2881
    %v2884 = vmax.f32 %v2883, 0.0
    %v2885 = vpack.c.bf16 %v2884, %v2884
    %v2886 = vld [vmem:[#allocation10] sm:$0xf]
    %v2887 = vld [vmem:[#allocation10 + $0x4] sm:$0xf]
    %v2888 = vld [vmem:[#allocation10 + $0x8] sm:$0xf]
    %v2889 = vld [vmem:[#allocation10 + $0xc] sm:$0xf]
    %v2890 = vld [vmem:[#allocation10 + $0x10] sm:$0xf]
    %v2891 = vld [vmem:[#allocation10 + $0x14] sm:$0xf]
    %v2892 = vld [vmem:[#allocation10 + $0x18] sm:$0xf]
    %v2893 = vld [vmem:[#allocation10 + $0x1c] sm:$0xf]
    %v2894 = vld [vmem:[#allocation10 + $0x20] sm:$0xf]
    %v2895 = vld [vmem:[#allocation10 + $0x24] sm:$0xf]
    %v2896 = vld [vmem:[#allocation10 + $0x28] sm:$0xf]
    %v2897 = vld [vmem:[#allocation10 + $0x2c] sm:$0xf]
    %v2898 = vld [vmem:[#allocation10 + $0x30] sm:$0xf]
    %v2899 = vld [vmem:[#allocation10 + $0x34] sm:$0xf]
    %v2900 = vld [vmem:[#allocation10 + $0x38] sm:$0xf]
    %v2901 = vld [vmem:[#allocation10 + $0x3c] sm:$0xf]
    %v2902 = vld [vmem:[%s6] sm:$0x1]
    %v2904 = vlaneseq
    %v2905 = vshrl.u32 %v2904, 7
    %v2906 = vsub.s32 0, %v2905
    %v2907 = vrot.slane %v2902, %v2906
    %v2925 = vunpack.c.l.b16 %v2886
    %v2926 = vunpack.c.l.b16 %v2887
    %v2927 = vunpack.c.l.b16 %v2888
    %v2928 = vunpack.c.l.b16 %v2889
    %v2929 = vunpack.c.l.b16 %v2890
    %v2930 = vunpack.c.l.b16 %v2891
    %v2931 = vunpack.c.l.b16 %v2892
    %v2932 = vunpack.c.l.b16 %v2893
    %v2933 = vunpack.c.l.b16 %v2894
    %v2934 = vunpack.c.l.b16 %v2895
    %v2935 = vunpack.c.l.b16 %v2896
    %v2936 = vunpack.c.l.b16 %v2897
    %v2937 = vunpack.c.l.b16 %v2898
    %v2938 = vunpack.c.l.b16 %v2899
    %v2939 = vunpack.c.l.b16 %v2900
    %v2940 = vunpack.c.l.b16 %v2901
    %v2941 = vpack.c.b16 %v2926, %v2925
    %v2942 = vpack.c.b16 %v2928, %v2927
    %v2943 = vpack.c.b16 %v2930, %v2929
    %v2944 = vpack.c.b16 %v2932, %v2931
    %v2945 = vpack.c.b16 %v2934, %v2933
    %v2946 = vpack.c.b16 %v2936, %v2935
    %v2947 = vpack.c.b16 %v2938, %v2937
    %v2948 = vpack.c.b16 %v2940, %v2939
    %2957 = vmatprep.subr.bf16.mxu0 0
    %2958 = vmatpush1.bf16.msra.mxu0 %v2941
    %2959 = vmatprep.subr.bf16.mxu0 0
    %2960 = vmatpush1.bf16.msra.mxu0 %v2942
    %2961 = vmatprep.subr.bf16.mxu0 0
    %2962 = vmatpush1.bf16.msra.mxu0 %v2943
    %2963 = vmatprep.subr.bf16.mxu0 0
    %2964 = vmatpush1.bf16.msra.mxu0 %v2944
    %2965 = vmatprep.subr.bf16.mxu0 0
    %2966 = vmatpush1.bf16.msra.mxu0 %v2945
    %2967 = vmatprep.subr.bf16.mxu0 0
    %2968 = vmatpush1.bf16.msra.mxu0 %v2946
    %2969 = vmatprep.subr.bf16.mxu0 0
    %2970 = vmatpush1.bf16.msra.mxu0 %v2947
    %2971 = vmatprep.subr.bf16.mxu0 0
    %2972 = vmatpush1.bf16.msra.mxu0 %v2948
    %2973 = vmatprep.subr.bf16.mxu0 0
    %2974 = vmatpush1.bf16.msra.mxu0 0
    %2975 = vmatprep.subr.bf16.mxu0 0
    %2976 = vmatpush1.bf16.msra.mxu0 0
    %2977 = vmatprep.subr.bf16.mxu0 0
    %2978 = vmatpush1.bf16.msra.mxu0 0
    %2979 = vmatprep.subr.bf16.mxu0 0
    %2980 = vmatpush1.bf16.msra.mxu0 0
    %2981 = vmatprep.subr.bf16.mxu0 0
    %2982 = vmatpush1.bf16.msra.mxu0 0
    %2983 = vmatprep.subr.bf16.mxu0 0
    %2984 = vmatpush1.bf16.msra.mxu0 0
    %2985 = vmatprep.subr.bf16.mxu0 0
    %2986 = vmatpush1.bf16.msra.mxu0 0
    %2987 = vmatprep.subr.bf16.mxu0 0
    %2988 = vmatpush1.bf16.msra.mxu0 0
    %2989 = vmatprep.mubr.bf16.mxu0 0
    %2990 = vmatmul.mubr.bf16.gmra.mrb[0].mxu0 %v2885
    %v2991 = vpop.f32.mrb[0].mxu0
    %v2992 = vadd.f32 %v2907, %v2991
    %v2993 = vpop.f32.mrb[0].mxu0
    %v2994 = vpop.f32.mrb[0].mxu0
    %v2995 = vpop.f32.mrb[0].mxu0
    %2996 = vdwg.mxu0
    %2997 = vst [vmem:[#allocation11] sm:$0xf] %v2992
    // Predicated region
    $region50: #{tpu_custom_call.1} parent=1 // pred_check
      _
    $region51: #{tpu_custom_call.1} parent=1 // pred_check_branch
      %2999 = sbr.rel (0) target = $region53
    $region52: #{tpu_custom_call.1} parent=1 // pred_region
      %s3001 = ssub.s32 64, 64
      %3002 = vsyncadd [#allocation4], %s3001
      %s3004 = sshll.u32 [#allocation11], 4
      %s3005 = int_to_ptr.vmem [resolvable:$true] %s3004
      %3007 = dma.vmem_to_hbm [thread:$0]  %s3005, 64, %s7, [#allocation4]
    $region53: #{tpu_custom_call.1} parent=1 // pred_fallthru
      _
    // Predicated region
    $region54: #{tpu_custom_call.1} parent=1 // pred_check
      _
    $region55: #{tpu_custom_call.1} parent=1 // pred_check_branch
      %3009 = sbr.rel (0) target = $region57
    $region56: #{tpu_custom_call.1} parent=1 // pred_region
      %3010 = dma.done [#allocation4], 64
    $region57: #{tpu_custom_call.1} parent=1 // pred_fallthru
      _
    %3011 = vsyncpa [#allocation3], 1
    %3012 = vsyncpa [#allocation6], 1
    %3013 = vsyncpa [#allocation9], 1
    %3014 = vsyncpa [#allocation4], 1

</llo_original>
